<compile_context>
chip_gen: v5e
topology: v5e:2x2
jax: 0.10.0
libtpu: 0.0.40
codegen_flags: <defaults>
</compile_context>

<pallas_src>
import functools

import jax
import jax.numpy as jnp
from jax.experimental import pallas as pl
from jax.experimental.pallas import tpu as pltpu


# ----------------------------------------------------------------------------
# Pallas kernel: full encoder stack, one grid step = (batch block, layer)
# ----------------------------------------------------------------------------
def stacked_encoder_kernel(*refs, n_heads, d_model, d_filter, seq_len, has_mask):
    if has_mask:
        (x_ref, bias_ref, wqkv_ref, wo_ref, w1_ref, w2_ref, vecs_ref,
         out_ref, act_ref) = refs
    else:
        (x_ref, wqkv_ref, wo_ref, w1_ref, w2_ref, vecs_ref,
         out_ref, act_ref) = refs
        bias_ref = None

    l = pl.program_id(1)
    n_layers = pl.num_programs(1)
    D, H, F, S = d_model, n_heads, d_filter, seq_len
    dh = D // H
    eps = 1e-5  # nn.LayerNorm default

    # Layer 0: seed the VMEM-resident activation slab from the input block.
    @pl.when(l == 0)
    def _():
        act_ref[...] = x_ref[...].astype(jnp.float32)

    x = act_ref[...]                 # (M, D) f32, resident across the layer axis
    M = x.shape[0]
    BB = M // S                      # batch elements in this block (static)

    # Packed per-layer small vectors: (8, W), f32.
    vecs = vecs_ref[...]
    ln1_g, ln1_b = vecs[0:1, :D], vecs[1:2, :D]
    bqkv = vecs[2:3, :3 * D]
    bo = vecs[3:4, :D]
    ln2_g, ln2_b = vecs[4:5, :D], vecs[5:6, :D]
    b1 = vecs[6:7, :F]
    b2 = vecs[7:8, :D]

    def layer_norm(v, g, b):
        mu = jnp.mean(v, axis=-1, keepdims=True)
        var = jnp.mean((v - mu) ** 2, axis=-1, keepdims=True)
        return (v - mu) * jax.lax.rsqrt(var + eps) * g + b

    # ---------------- self-attention sublayer (pre-norm) ----------------
    # TODO(synk): MultiHeadAttention is not defined in the provided source;
    # standard QKV/O-projection scaled-dot-product attention is assumed.
    xn = layer_norm(x, ln1_g, ln1_b)
    qkv = jnp.dot(xn.astype(jnp.bfloat16), wqkv_ref[...],
                  preferred_element_type=jnp.float32) + bqkv         # (M, 3D) f32

    def split_heads(col0):
        # -> (BB*H, S, dh) via static slices + leading-dim stack (supported
        # relayout; see header note about the reshape form at production dh).
        parts = []
        for b in range(BB):
            rows = qkv[b * S:(b + 1) * S]                            # (S, 3D)
            for h in range(H):
                parts.append(rows[:, col0 + h * dh: col0 + (h + 1) * dh])
        return jnp.stack(parts, axis=0)

    q = split_heads(0).astype(jnp.bfloat16)
    k = split_heads(D).astype(jnp.bfloat16)
    v = split_heads(2 * D).astype(jnp.bfloat16)

    scale = 1.0 / jnp.sqrt(jnp.float32(dh))
    scores = jnp.einsum('bqd,bkd->bqk', q, k,
                        preferred_element_type=jnp.float32) * scale   # (BB*H,S,S)
    if has_mask:
        bias = bias_ref[...]                                          # (BB, S, S)
        bias_h = jnp.stack([bias[b] for b in range(BB) for _ in range(H)],
                           axis=0)                                    # (BB*H,S,S)
        scores = scores + bias_h
    scores = scores - jnp.max(scores, axis=-1, keepdims=True)
    p = jnp.exp(scores)
    p = p * pl.reciprocal(jnp.sum(p, axis=-1, keepdims=True), approx=True)
    ctx = jnp.einsum('bqk,bkd->bqd', p.astype(jnp.bfloat16), v,
                     preferred_element_type=jnp.float32)              # (BB*H,S,dh)
    # Merge heads back to lanes, batch elements back to rows -> (M, D).
    ctx = jnp.concatenate(
        [jnp.concatenate([ctx[b * H + h] for h in range(H)], axis=-1)
         for b in range(BB)], axis=0)

    attn = jnp.dot(ctx.astype(jnp.bfloat16), wo_ref[...],
                   preferred_element_type=jnp.float32) + bo
    res = attn + x                                                    # residual

    # ---------------- feed-forward sublayer (pre-norm) ----------------
    rn = layer_norm(res, ln2_g, ln2_b)
    h1 = jnp.maximum(
        jnp.dot(rn.astype(jnp.bfloat16), w1_ref[...],
                preferred_element_type=jnp.float32) + b1, 0.0)
    h2 = jnp.dot(h1.astype(jnp.bfloat16), w2_ref[...],
                 preferred_element_type=jnp.float32) + b2
    new_act = h2 + res        # dropout prob is 0 (None) in the reference setup

    act_ref[...] = new_act

    @pl.when(l == n_layers - 1)
    def _():
        out_ref[...] = new_act.astype(out_ref.dtype)


# ----------------------------------------------------------------------------
# Wrapper: single pallas_call over (batch blocks, layers)
# ----------------------------------------------------------------------------
def transformer_encoder_stack(x, stacked_params, n_heads, encoder_mask=None,
                              batch_blocks=None):
    B, S, D = x.shape
    L, _, three_d = stacked_params['wqkv'].shape
    F = stacked_params['w1'].shape[-1]
    W = stacked_params['vecs'].shape[-1]
    has_mask = encoder_mask is not None

    # NB batch blocks: weights are streamed NB times per layer (not B times);
    # NB=2 keeps a size-2 "parallel" grid axis so both v7x TensorCores get
    # work (no-op on v5e/v6e).  Each block folds BB=B/NB elements so matmuls
    # run with M = BB*S rows.
    if batch_blocks is None:
        batch_blocks = 2 if (B % 2 == 0 and B >= 2) else 1
    NB = batch_blocks
    assert B % NB == 0, "batch must divide evenly into batch blocks"
    BB = B // NB
    M = BB * S

    x2 = x.reshape(B * S, D)

    args = [x2]
    in_specs = [pl.BlockSpec((M, D), lambda b, l: (b, 0))]
    if has_mask:
        mask = encoder_mask
        if mask.ndim == 2:
            mask = jnp.broadcast_to(mask[None], (B, S, S))
        assert mask.shape == (B, S, S), "encoder_mask must be (B, S, S)"
        # Layer-invariant additive bias, precomputed once (True/1.0 = attend).
        bias = (1.0 - mask.astype(jnp.float32)) * (-1e9)
        args.append(bias)
        in_specs.append(pl.BlockSpec((BB, S, S), lambda b, l: (b, 0, 0)))
    args += [stacked_params['wqkv'], stacked_params['wo'],
             stacked_params['w1'], stacked_params['w2'],
             stacked_params['vecs']]
    # NOTE: at production sizes sweep pipeline_mode=pl.Buffered(3) on w1/w2 if
    # the weight DMA is exposed; on v7x under VMEM pressure keep Buffered(2)
    # and rely on the bf16 weights instead.
    in_specs += [
        pl.BlockSpec((None, D, three_d), lambda b, l: (l, 0, 0)),
        pl.BlockSpec((None, D, D), lambda b, l: (l, 0, 0)),
        pl.BlockSpec((None, D, F), lambda b, l: (l, 0, 0)),
        pl.BlockSpec((None, F, D), lambda b, l: (l, 0, 0)),
        pl.BlockSpec((None, 8, W), lambda b, l: (l, 0, 0)),
    ]

    # Explicit VMEM budget from the actual double-buffered blocks (+ headroom).
    def nbytes(shape, dtype):
        n = 1
        for s in shape:
            n *= int(s)
        return n * jnp.dtype(dtype).itemsize

    blk_bytes = (nbytes((M, D), x.dtype)
                 + (nbytes((BB, S, S), jnp.float32) if has_mask else 0)
                 + nbytes((D, three_d), stacked_params['wqkv'].dtype)
                 + nbytes((D, D), stacked_params['wo'].dtype)
                 + nbytes((D, F), stacked_params['w1'].dtype)
                 + nbytes((F, D), stacked_params['w2'].dtype)
                 + nbytes((8, W), stacked_params['vecs'].dtype)
                 + nbytes((M, D), x.dtype))                  # output block
    vmem_limit = int(2 * blk_bytes + nbytes((M, D), jnp.float32)) + (16 << 20)

    kernel = functools.partial(stacked_encoder_kernel, n_heads=n_heads,
                               d_model=D, d_filter=F, seq_len=S,
                               has_mask=has_mask)
    out = pl.pallas_call(
        kernel,
        out_shape=jax.ShapeDtypeStruct((B * S, D), x.dtype),
        grid_spec=pltpu.PrefetchScalarGridSpec(
            num_scalar_prefetch=0,
            grid=(NB, L),
            in_specs=in_specs,
            out_specs=pl.BlockSpec((M, D), lambda b, l: (b, 0)),
            scratch_shapes=[pltpu.VMEM((M, D), jnp.float32)]),
        compiler_params=pltpu.CompilerParams(
            dimension_semantics=("parallel", "arbitrary"),
            vmem_limit_bytes=vmem_limit),
    )(*args)
    return out.reshape(B, S, D)


# ----------------------------------------------------------------------------
# Parameter construction (deterministic, synthetic) — pre-stacked per layer.
# Matmul weights stored in bf16 (HBM + VMEM + MXU operands); small vectors f32.
# ----------------------------------------------------------------------------
def xavier_uniform(key, fan_in, fan_out):
    limit = jnp.sqrt(6.0 / (fan_in + fan_out))
    return jax.random.uniform(key, (fan_in, fan_out), jnp.float32, -limit, limit)


def make_stacked_params(key, n_layers, d_model, d_filter):
    W = max(3 * d_model, d_filter)   # lane-dense packed width (multiple of 128)

    def row(v):
        return jnp.pad(v, (0, W - v.shape[0]))

    keys = jax.random.split(key, n_layers)
    wqkv, wo, w1, w2, vecs = [], [], [], [], []
    for i in range(n_layers):
        ks = jax.random.split(keys[i], 6)
        wq = xavier_uniform(ks[0], d_model, d_model)
        wk = xavier_uniform(ks[1], d_model, d_model)
        wv = xavier_uniform(ks[2], d_model, d_model)
        wqkv.append(jnp.concatenate([wq, wk, wv], axis=1))       # (D, 3D)
        wo.append(xavier_uniform(ks[3], d_model, d_model))
        w1.append(xavier_uniform(ks[4], d_model, d_filter))
        w2.append(xavier_uniform(ks[5], d_filter, d_model))
        vecs.append(jnp.stack([
            row(jnp.ones((d_model,), jnp.float32)),       # ln1 gamma
            row(jnp.zeros((d_model,), jnp.float32)),      # ln1 beta
            row(jnp.zeros((3 * d_model,), jnp.float32)),  # bq|bk|bv
            row(jnp.zeros((d_model,), jnp.float32)),      # bo
            row(jnp.ones((d_model,), jnp.float32)),       # ln2 gamma
            row(jnp.zeros((d_model,), jnp.float32)),      # ln2 beta
            row(jnp.zeros((d_filter,), jnp.float32)),     # b1
            row(jnp.zeros((d_model,), jnp.float32)),      # b2
        ], axis=0))                                               # (8, W)
    return {
        'wqkv': jnp.stack(wqkv).astype(jnp.bfloat16),
        'wo': jnp.stack(wo).astype(jnp.bfloat16),
        'w1': jnp.stack(w1).astype(jnp.bfloat16),
        'w2': jnp.stack(w2).astype(jnp.bfloat16),
        'vecs': jnp.stack(vecs),                                  # f32
    }


# ----------------------------------------------------------------------------
# TransformerEncoder forward
# ----------------------------------------------------------------------------
def transformer_encoder(states, actions, embed_params, stacked_params, n_heads,
                        encoder_mask=None):
    # TODO(synk): the reference `embedding_layer` is injected at construction
    # and not defined in the provided source; a simple linear embedding of
    # concat(states, actions) is used here as deterministic glue (plain JAX).
    x = jnp.concatenate([states, actions], axis=-1)
    x = jnp.einsum('bsf,fd->bsd', x, embed_params['w']) + embed_params['b']
    return transformer_encoder_stack(x, stacked_params, n_heads, encoder_mask)


# ----------------------------------------------------------------------------
# Main
# ----------------------------------------------------------------------------
if __name__ == "__main__":
    # Small shapes, lane-dense feature dims (multiples of 128).
    B, S = 2, 8
    state_dim, action_dim = 6, 4
    d_model = 128       # == embed_size (residuals require hidden_size == embed_size)
    d_filter = 256
    n_heads = 4
    n_layers = 2

    root = jax.random.PRNGKey(0)
    k_states, k_actions, k_embed, k_blocks = jax.random.split(root, 4)

    states = jax.random.normal(k_states, (B, S, state_dim), jnp.float32)
    actions = jax.random.normal(k_actions, (B, S, action_dim), jnp.float32)

    embed_params = {
        'w': xavier_uniform(k_embed, state_dim + action_dim, d_model),
        'b': jnp.zeros((1, d_model), jnp.float32),
    }
    stacked_params = make_stacked_params(k_blocks, n_layers, d_model, d_filter)

    # Boolean (B, S, S) mask per the module docstring; causal so no row is
    # fully masked.
    encoder_mask = jnp.broadcast_to(jnp.tril(jnp.ones((S, S), dtype=bool)),
                                    (B, S, S))

    out = transformer_encoder(states, actions, embed_params, stacked_params,
                              n_heads, encoder_mask=encoder_mask)
    out = jax.block_until_ready(out)
    assert out.shape == (B, S, d_model)
    assert bool(jnp.all(jnp.isfinite(out)))
    print("KERNEL_OK")
</pallas_src>

<mosaic_0001>
module attributes {stable_mosaic.version = 11 : i64} {
  func.func @stacked_encoder_kernel(%arg0: i32, %arg1: i32, %arg2: memref<8x128xf32, #tpu.memory_space<vmem>>, %arg3: memref<1x8x8xf32, #tpu.memory_space<vmem>>, %arg4: memref<1x128x384xbf16, #tpu.memory_space<vmem>>, %arg5: memref<1x128x128xbf16, #tpu.memory_space<vmem>>, %arg6: memref<1x128x256xbf16, #tpu.memory_space<vmem>>, %arg7: memref<1x256x128xbf16, #tpu.memory_space<vmem>>, %arg8: memref<1x8x384xf32, #tpu.memory_space<vmem>>, %arg9: memref<8x128xf32, #tpu.memory_space<vmem>>, %arg10: memref<8x128xf32, #tpu.memory_space<vmem>>) attributes {dimension_semantics = [#tpu.dimension_semantics<parallel>, #tpu.dimension_semantics<arbitrary>], iteration_bounds = array<i64: 2, 2>, scalar_prefetch = 0 : i64, scratch_operands = 1 : i64, tpu.core_type = #tpu.core_type<tc>, window_params = [{transform_indices = @transform_0, window_bounds = array<i64: 8, 128>}, {transform_indices = @transform_1, window_bounds = array<i64: 1, 8, 8>}, {transform_indices = @transform_2, window_bounds = array<i64: 1, 128, 384>}, {transform_indices = @transform_3, window_bounds = array<i64: 1, 128, 128>}, {transform_indices = @transform_4, window_bounds = array<i64: 1, 128, 256>}, {transform_indices = @transform_5, window_bounds = array<i64: 1, 256, 128>}, {transform_indices = @transform_6, window_bounds = array<i64: 1, 8, 384>}, {transform_indices = @transform_7, window_bounds = array<i64: 8, 128>}]} {
    %c0_i32 = arith.constant 0 : i32
    %0 = arith.cmpi eq, %arg1, %c0_i32 : i32
    %1 = arith.extui %0 : i1 to i32
    %c0_i32_0 = arith.constant 0 : i32
    %2 = arith.cmpi ne, %1, %c0_i32_0 : i32
    scf.if %2 {
      %c0_43 = arith.constant 0 : index
      %c0_44 = arith.constant 0 : index
      %157 = vector.load %arg2[%c0_43, %c0_44] : memref<8x128xf32, #tpu.memory_space<vmem>>, vector<8x128xf32>
      %c0_45 = arith.constant 0 : index
      %c0_46 = arith.constant 0 : index
      %158 = vector.load %arg10[%c0_45, %c0_46] : memref<8x128xf32, #tpu.memory_space<vmem>>, vector<8x128xf32>
      tpu.vector_store %arg10[%c0_45, %c0_46], %157 {strides = array<i32>} : memref<8x128xf32, #tpu.memory_space<vmem>>, vector<8x128xf32>,
    } else {
    }
    %c0 = arith.constant 0 : index
    %c0_1 = arith.constant 0 : index
    %3 = vector.load %arg10[%c0, %c0_1] : memref<8x128xf32, #tpu.memory_space<vmem>>, vector<8x128xf32>
    %c0_2 = arith.constant 0 : index
    %c0_3 = arith.constant 0 : index
    %c0_4 = arith.constant 0 : index
    %4 = vector.load %arg8[%c0_2, %c0_3, %c0_4] : memref<1x8x384xf32, #tpu.memory_space<vmem>>, vector<1x8x384xf32>
    %5 = vector.shape_cast %4 : vector<1x8x384xf32> to vector<8x384xf32>
    %6 = vector.extract_strided_slice %5 {offsets = [0, 0], sizes = [1, 128], strides = [1, 1]} : vector<8x384xf32> to vector<1x128xf32>
    %7 = vector.extract_strided_slice %5 {offsets = [1, 0], sizes = [1, 128], strides = [1, 1]} : vector<8x384xf32> to vector<1x128xf32>
    %8 = vector.extract_strided_slice %5 {offsets = [2, 0], sizes = [1, 384], strides = [1, 1]} : vector<8x384xf32> to vector<1x384xf32>
    %9 = vector.extract_strided_slice %5 {offsets = [3, 0], sizes = [1, 128], strides = [1, 1]} : vector<8x384xf32> to vector<1x128xf32>
    %10 = vector.extract_strided_slice %5 {offsets = [4, 0], sizes = [1, 128], strides = [1, 1]} : vector<8x384xf32> to vector<1x128xf32>
    %11 = vector.extract_strided_slice %5 {offsets = [5, 0], sizes = [1, 128], strides = [1, 1]} : vector<8x384xf32> to vector<1x128xf32>
    %12 = vector.extract_strided_slice %5 {offsets = [6, 0], sizes = [1, 256], strides = [1, 1]} : vector<8x384xf32> to vector<1x256xf32>
    %13 = vector.extract_strided_slice %5 {offsets = [7, 0], sizes = [1, 128], strides = [1, 1]} : vector<8x384xf32> to vector<1x128xf32>
    %cst = arith.constant dense<0.000000e+00> : vector<8xf32>
    %14 = vector.multi_reduction <add>, %3, %cst [1] : vector<8x128xf32> to vector<8xf32>
    %15 = vector.shape_cast %14 : vector<8xf32> to vector<8x1xf32>
    %cst_5 = arith.constant 1.280000e+02 : f32
    %16 = vector.broadcast %cst_5 : f32 to vector<8x1xf32>
    %17 = arith.divf %15, %16 : vector<8x1xf32>
    %18 = vector.broadcast %17 : vector<8x1xf32> to vector<8x128xf32>
    %19 = arith.subf %3, %18 : vector<8x128xf32>
    %20 = arith.mulf %19, %19 : vector<8x128xf32>
    %cst_6 = arith.constant dense<0.000000e+00> : vector<8xf32>
    %21 = vector.multi_reduction <add>, %20, %cst_6 [1] : vector<8x128xf32> to vector<8xf32>
    %22 = vector.shape_cast %21 : vector<8xf32> to vector<8x1xf32>
    %cst_7 = arith.constant 1.280000e+02 : f32
    %23 = vector.broadcast %cst_7 : f32 to vector<8x1xf32>
    %24 = arith.divf %22, %23 : vector<8x1xf32>
    %25 = vector.broadcast %17 : vector<8x1xf32> to vector<8x128xf32>
    %26 = arith.subf %3, %25 : vector<8x128xf32>
    %cst_8 = arith.constant 9.99999974E-6 : f32
    %27 = vector.broadcast %cst_8 : f32 to vector<8x1xf32>
    %28 = arith.addf %24, %27 : vector<8x1xf32>
    %29 = math.rsqrt %28 : vector<8x1xf32>
    %30 = vector.broadcast %29 : vector<8x1xf32> to vector<8x128xf32>
    %31 = arith.mulf %26, %30 : vector<8x128xf32>
    %32 = vector.broadcast %6 : vector<1x128xf32> to vector<8x128xf32>
    %33 = arith.mulf %31, %32 : vector<8x128xf32>
    %34 = vector.broadcast %7 : vector<1x128xf32> to vector<8x128xf32>
    %35 = arith.addf %33, %34 : vector<8x128xf32>
    %36 = arith.truncf %35 : vector<8x128xf32> to vector<8x128xbf16>
    %c0_9 = arith.constant 0 : index
    %c0_10 = arith.constant 0 : index
    %c0_11 = arith.constant 0 : index
    %37 = vector.load %arg4[%c0_9, %c0_10, %c0_11] : memref<1x128x384xbf16, #tpu.memory_space<vmem>>, vector<1x128x384xbf16>
    %38 = vector.shape_cast %37 : vector<1x128x384xbf16> to vector<128x384xbf16>
    %cst_12 = arith.constant dense<0.000000e+00> : vector<8x384xf32>
    %39 = tpu.matmul %36, %38, %cst_12 {dimension_numbers = #tpu.dot_dimension_numbers<[1], [0], [0], [1], [0, 0, 1, 1], [], []>} : vector<8x128xbf16>, vector<128x384xbf16>, vector<8x384xf32> -> vector<8x384xf32>
    %40 = vector.broadcast %8 : vector<1x384xf32> to vector<8x384xf32>
    %41 = arith.addf %39, %40 : vector<8x384xf32>
    %42 = vector.extract_strided_slice %41 {offsets = [0, 0], sizes = [8, 32], strides = [1, 1]} : vector<8x384xf32> to vector<8x32xf32>
    %43 = vector.extract_strided_slice %41 {offsets = [0, 32], sizes = [8, 32], strides = [1, 1]} : vector<8x384xf32> to vector<8x32xf32>
    %44 = vector.extract_strided_slice %41 {offsets = [0, 64], sizes = [8, 32], strides = [1, 1]} : vector<8x384xf32> to vector<8x32xf32>
    %45 = vector.extract_strided_slice %41 {offsets = [0, 96], sizes = [8, 32], strides = [1, 1]} : vector<8x384xf32> to vector<8x32xf32>
    %46 = vector.shape_cast %42 : vector<8x32xf32> to vector<1x8x32xf32>
    %47 = vector.shape_cast %43 : vector<8x32xf32> to vector<1x8x32xf32>
    %48 = vector.shape_cast %44 : vector<8x32xf32> to vector<1x8x32xf32>
    %49 = vector.shape_cast %45 : vector<8x32xf32> to vector<1x8x32xf32>
    %50 = tpu.concatenate %46, %47, %48, %49 in 0 : vector<1x8x32xf32>, vector<1x8x32xf32>, vector<1x8x32xf32>, vector<1x8x32xf32> -> vector<4x8x32xf32>
    %51 = arith.truncf %50 : vector<4x8x32xf32> to vector<4x8x32xbf16>
    %52 = vector.extract_strided_slice %41 {offsets = [0, 128], sizes = [8, 32], strides = [1, 1]} : vector<8x384xf32> to vector<8x32xf32>
    %53 = vector.extract_strided_slice %41 {offsets = [0, 160], sizes = [8, 32], strides = [1, 1]} : vector<8x384xf32> to vector<8x32xf32>
    %54 = vector.extract_strided_slice %41 {offsets = [0, 192], sizes = [8, 32], strides = [1, 1]} : vector<8x384xf32> to vector<8x32xf32>
    %55 = vector.extract_strided_slice %41 {offsets = [0, 224], sizes = [8, 32], strides = [1, 1]} : vector<8x384xf32> to vector<8x32xf32>
    %56 = vector.shape_cast %52 : vector<8x32xf32> to vector<1x8x32xf32>
    %57 = vector.shape_cast %53 : vector<8x32xf32> to vector<1x8x32xf32>
    %58 = vector.shape_cast %54 : vector<8x32xf32> to vector<1x8x32xf32>
    %59 = vector.shape_cast %55 : vector<8x32xf32> to vector<1x8x32xf32>
    %60 = tpu.concatenate %56, %57, %58, %59 in 0 : vector<1x8x32xf32>, vector<1x8x32xf32>, vector<1x8x32xf32>, vector<1x8x32xf32> -> vector<4x8x32xf32>
    %61 = arith.truncf %60 : vector<4x8x32xf32> to vector<4x8x32xbf16>
    %62 = vector.extract_strided_slice %41 {offsets = [0, 256], sizes = [8, 32], strides = [1, 1]} : vector<8x384xf32> to vector<8x32xf32>
    %63 = vector.extract_strided_slice %41 {offsets = [0, 288], sizes = [8, 32], strides = [1, 1]} : vector<8x384xf32> to vector<8x32xf32>
    %64 = vector.extract_strided_slice %41 {offsets = [0, 320], sizes = [8, 32], strides = [1, 1]} : vector<8x384xf32> to vector<8x32xf32>
    %65 = vector.extract_strided_slice %41 {offsets = [0, 352], sizes = [8, 32], strides = [1, 1]} : vector<8x384xf32> to vector<8x32xf32>
    %66 = vector.shape_cast %62 : vector<8x32xf32> to vector<1x8x32xf32>
    %67 = vector.shape_cast %63 : vector<8x32xf32> to vector<1x8x32xf32>
    %68 = vector.shape_cast %64 : vector<8x32xf32> to vector<1x8x32xf32>
    %69 = vector.shape_cast %65 : vector<8x32xf32> to vector<1x8x32xf32>
    %70 = tpu.concatenate %66, %67, %68, %69 in 0 : vector<1x8x32xf32>, vector<1x8x32xf32>, vector<1x8x32xf32>, vector<1x8x32xf32> -> vector<4x8x32xf32>
    %71 = arith.truncf %70 : vector<4x8x32xf32> to vector<4x8x32xbf16>
    %cst_13 = arith.constant 3.200000e+01 : f32
    %72 = math.sqrt %cst_13 : f32
    %cst_14 = arith.constant 1.000000e+00 : f32
    %73 = arith.divf %cst_14, %72 : f32
    "tpu.trace_start"() <{level = 10 : i32, message = "bqd,bkd->bqk"}> : () -> ()
    %cst_15 = arith.constant dense<0.000000e+00> : vector<4x8x8xf32>
    %74 = tpu.matmul %51, %61, %cst_15 {dimension_numbers = #tpu.dot_dimension_numbers<[2], [2], [1], [1], [0, 0, 0, 1, 1, 1], [0], [0]>} : vector<4x8x32xbf16>, vector<4x8x32xbf16>, vector<4x8x8xf32> -> vector<4x8x8xf32>
    "tpu.trace_stop"() : () -> ()
    %75 = vector.broadcast %73 : f32 to vector<4x8x8xf32>
    %76 = arith.mulf %74, %75 : vector<4x8x8xf32>
    %c0_16 = arith.constant 0 : index
    %c0_17 = arith.constant 0 : index
    %c0_18 = arith.constant 0 : index
    %77 = vector.load %arg3[%c0_16, %c0_17, %c0_18] : memref<1x8x8xf32, #tpu.memory_space<vmem>>, vector<1x8x8xf32>
    %78 = vector.shape_cast %77 : vector<1x8x8xf32> to vector<8x8xf32>
    %79 = vector.shape_cast %77 : vector<1x8x8xf32> to vector<8x8xf32>
    %80 = vector.shape_cast %77 : vector<1x8x8xf32> to vector<8x8xf32>
    %81 = vector.shape_cast %77 : vector<1x8x8xf32> to vector<8x8xf32>
    %82 = vector.shape_cast %78 : vector<8x8xf32> to vector<1x8x8xf32>
    %83 = vector.shape_cast %79 : vector<8x8xf32> to vector<1x8x8xf32>
    %84 = vector.shape_cast %80 : vector<8x8xf32> to vector<1x8x8xf32>
    %85 = vector.shape_cast %81 : vector<8x8xf32> to vector<1x8x8xf32>
    %86 = tpu.concatenate %82, %83, %84, %85 in 0 : vector<1x8x8xf32>, vector<1x8x8xf32>, vector<1x8x8xf32>, vector<1x8x8xf32> -> vector<4x8x8xf32>
    %87 = arith.addf %76, %86 : vector<4x8x8xf32>
    %cst_19 = arith.constant dense<0xFF800000> : vector<4x8xf32>
    %88 = vector.multi_reduction <maximumf>, %87, %cst_19 [2] : vector<4x8x8xf32> to vector<4x8xf32>
    %89 = vector.shape_cast %88 : vector<4x8xf32> to vector<4x8x1xf32>
    %90 = vector.broadcast %89 : vector<4x8x1xf32> to vector<4x8x8xf32>
    %91 = arith.subf %87, %90 : vector<4x8x8xf32>
    %92 = math.exp %91 : vector<4x8x8xf32>
    %cst_20 = arith.constant dense<0.000000e+00> : vector<4x8xf32>
    %93 = vector.multi_reduction <add>, %92, %cst_20 [2] : vector<4x8x8xf32> to vector<4x8xf32>
    %94 = vector.shape_cast %93 : vector<4x8xf32> to vector<4x8x1xf32>
    %95 = tpu.reciprocal %94 {approx = true} : vector<4x8x1xf32> -> vector<4x8x1xf32>
    %96 = vector.broadcast %95 : vector<4x8x1xf32> to vector<4x8x8xf32>
    %97 = arith.mulf %92, %96 : vector<4x8x8xf32>
    %98 = arith.truncf %97 : vector<4x8x8xf32> to vector<4x8x8xbf16>
    "tpu.trace_start"() <{level = 10 : i32, message = "bqk,bkd->bqd"}> : () -> ()
    %cst_21 = arith.constant dense<0.000000e+00> : vector<4x8x32xf32>
    %99 = tpu.matmul %98, %71, %cst_21 {dimension_numbers = #tpu.dot_dimension_numbers<[2], [1], [1], [2], [0, 0, 0, 1, 1, 2], [0], [0]>} : vector<4x8x8xbf16>, vector<4x8x32xbf16>, vector<4x8x32xf32> -> vector<4x8x32xf32>
    "tpu.trace_stop"() : () -> ()
    %100 = vector.extract_strided_slice %99 {offsets = [0, 0, 0], sizes = [1, 8, 32], strides = [1, 1, 1]} : vector<4x8x32xf32> to vector<1x8x32xf32>
    %101 = vector.shape_cast %100 : vector<1x8x32xf32> to vector<8x32xf32>
    %102 = vector.extract_strided_slice %99 {offsets = [1, 0, 0], sizes = [1, 8, 32], strides = [1, 1, 1]} : vector<4x8x32xf32> to vector<1x8x32xf32>
    %103 = vector.shape_cast %102 : vector<1x8x32xf32> to vector<8x32xf32>
    %104 = vector.extract_strided_slice %99 {offsets = [2, 0, 0], sizes = [1, 8, 32], strides = [1, 1, 1]} : vector<4x8x32xf32> to vector<1x8x32xf32>
    %105 = vector.shape_cast %104 : vector<1x8x32xf32> to vector<8x32xf32>
    %106 = vector.extract_strided_slice %99 {offsets = [3, 0, 0], sizes = [1, 8, 32], strides = [1, 1, 1]} : vector<4x8x32xf32> to vector<1x8x32xf32>
    %107 = vector.shape_cast %106 : vector<1x8x32xf32> to vector<8x32xf32>
    %108 = tpu.concatenate %101, %103, %105, %107 in 1 : vector<8x32xf32>, vector<8x32xf32>, vector<8x32xf32>, vector<8x32xf32> -> vector<8x128xf32>
    %109 = arith.truncf %108 : vector<8x128xf32> to vector<8x128xbf16>
    %c0_22 = arith.constant 0 : index
    %c0_23 = arith.constant 0 : index
    %c0_24 = arith.constant 0 : index
    %110 = vector.load %arg5[%c0_22, %c0_23, %c0_24] : memref<1x128x128xbf16, #tpu.memory_space<vmem>>, vector<1x128x128xbf16>
    %111 = vector.shape_cast %110 : vector<1x128x128xbf16> to vector<128x128xbf16>
    %cst_25 = arith.constant dense<0.000000e+00> : vector<8x128xf32>
    %112 = tpu.matmul %109, %111, %cst_25 {dimension_numbers = #tpu.dot_dimension_numbers<[1], [0], [0], [1], [0, 0, 1, 1], [], []>} : vector<8x128xbf16>, vector<128x128xbf16>, vector<8x128xf32> -> vector<8x128xf32>
    %113 = vector.broadcast %9 : vector<1x128xf32> to vector<8x128xf32>
    %114 = arith.addf %112, %113 : vector<8x128xf32>
    %115 = arith.addf %114, %3 : vector<8x128xf32>
    %cst_26 = arith.constant dense<0.000000e+00> : vector<8xf32>
    %116 = vector.multi_reduction <add>, %115, %cst_26 [1] : vector<8x128xf32> to vector<8xf32>
    %117 = vector.shape_cast %116 : vector<8xf32> to vector<8x1xf32>
    %cst_27 = arith.constant 1.280000e+02 : f32
    %118 = vector.broadcast %cst_27 : f32 to vector<8x1xf32>
    %119 = arith.divf %117, %118 : vector<8x1xf32>
    %120 = vector.broadcast %119 : vector<8x1xf32> to vector<8x128xf32>
    %121 = arith.subf %115, %120 : vector<8x128xf32>
    %122 = arith.mulf %121, %121 : vector<8x128xf32>
    %cst_28 = arith.constant dense<0.000000e+00> : vector<8xf32>
    %123 = vector.multi_reduction <add>, %122, %cst_28 [1] : vector<8x128xf32> to vector<8xf32>
    %124 = vector.shape_cast %123 : vector<8xf32> to vector<8x1xf32>
    %cst_29 = arith.constant 1.280000e+02 : f32
    %125 = vector.broadcast %cst_29 : f32 to vector<8x1xf32>
    %126 = arith.divf %124, %125 : vector<8x1xf32>
    %127 = vector.broadcast %119 : vector<8x1xf32> to vector<8x128xf32>
    %128 = arith.subf %115, %127 : vector<8x128xf32>
    %cst_30 = arith.constant 9.99999974E-6 : f32
    %129 = vector.broadcast %cst_30 : f32 to vector<8x1xf32>
    %130 = arith.addf %126, %129 : vector<8x1xf32>
    %131 = math.rsqrt %130 : vector<8x1xf32>
    %132 = vector.broadcast %131 : vector<8x1xf32> to vector<8x128xf32>
    %133 = arith.mulf %128, %132 : vector<8x128xf32>
    %134 = vector.broadcast %10 : vector<1x128xf32> to vector<8x128xf32>
    %135 = arith.mulf %133, %134 : vector<8x128xf32>
    %136 = vector.broadcast %11 : vector<1x128xf32> to vector<8x128xf32>
    %137 = arith.addf %135, %136 : vector<8x128xf32>
    %138 = arith.truncf %137 : vector<8x128xf32> to vector<8x128xbf16>
    %c0_31 = arith.constant 0 : index
    %c0_32 = arith.constant 0 : index
    %c0_33 = arith.constant 0 : index
    %139 = vector.load %arg6[%c0_31, %c0_32, %c0_33] : memref<1x128x256xbf16, #tpu.memory_space<vmem>>, vector<1x128x256xbf16>
    %140 = vector.shape_cast %139 : vector<1x128x256xbf16> to vector<128x256xbf16>
    %cst_34 = arith.constant dense<0.000000e+00> : vector<8x256xf32>
    %141 = tpu.matmul %138, %140, %cst_34 {dimension_numbers = #tpu.dot_dimension_numbers<[1], [0], [0], [1], [0, 0, 1, 1], [], []>} : vector<8x128xbf16>, vector<128x256xbf16>, vector<8x256xf32> -> vector<8x256xf32>
    %142 = vector.broadcast %12 : vector<1x256xf32> to vector<8x256xf32>
    %143 = arith.addf %141, %142 : vector<8x256xf32>
    %cst_35 = arith.constant 0.000000e+00 : f32
    %144 = vector.broadcast %cst_35 : f32 to vector<8x256xf32>
    %145 = arith.maximumf %143, %144 : vector<8x256xf32>
    %146 = arith.truncf %145 : vector<8x256xf32> to vector<8x256xbf16>
    %c0_36 = arith.constant 0 : index
    %c0_37 = arith.constant 0 : index
    %c0_38 = arith.constant 0 : index
    %147 = vector.load %arg7[%c0_36, %c0_37, %c0_38] : memref<1x256x128xbf16, #tpu.memory_space<vmem>>, vector<1x256x128xbf16>
    %148 = vector.shape_cast %147 : vector<1x256x128xbf16> to vector<256x128xbf16>
    %cst_39 = arith.constant dense<0.000000e+00> : vector<8x128xf32>
    %149 = tpu.matmul %146, %148, %cst_39 {dimension_numbers = #tpu.dot_dimension_numbers<[1], [0], [0], [1], [0, 0, 1, 1], [], []>} : vector<8x256xbf16>, vector<256x128xbf16>, vector<8x128xf32> -> vector<8x128xf32>
    %150 = vector.broadcast %13 : vector<1x128xf32> to vector<8x128xf32>
    %151 = arith.addf %149, %150 : vector<8x128xf32>
    %152 = arith.addf %151, %115 : vector<8x128xf32>
    %c0_40 = arith.constant 0 : index
    %c0_41 = arith.constant 0 : index
    %153 = vector.load %arg10[%c0_40, %c0_41] : memref<8x128xf32, #tpu.memory_space<vmem>>, vector<8x128xf32>
    tpu.vector_store %arg10[%c0_40, %c0_41], %152 {strides = array<i32>} : memref<8x128xf32, #tpu.memory_space<vmem>>, vector<8x128xf32>,
    %c1_i32 = arith.constant 1 : i32
    %154 = arith.cmpi eq, %arg1, %c1_i32 : i32
    %155 = arith.extui %154 : i1 to i32
    %c0_i32_42 = arith.constant 0 : i32
    %156 = arith.cmpi ne, %155, %c0_i32_42 : i32
    scf.if %156 {
      %c0_43 = arith.constant 0 : index
      %c0_44 = arith.constant 0 : index
      %157 = vector.load %arg9[%c0_43, %c0_44] : memref<8x128xf32, #tpu.memory_space<vmem>>, vector<8x128xf32>
      tpu.vector_store %arg9[%c0_43, %c0_44], %152 {strides = array<i32>} : memref<8x128xf32, #tpu.memory_space<vmem>>, vector<8x128xf32>,
    } else {
    }
    return
  }
  func.func @transform_0(%arg0: i32, %arg1: i32) -> (i32, i32) {
    %c0_i32 = arith.constant 0 : i32
    %c0_i32_0 = arith.constant 0 : i32
    return %arg0, %c0_i32 : i32, i32
  }
  func.func @transform_1(%arg0: i32, %arg1: i32) -> (i32, i32, i32) {
    %c0_i32 = arith.constant 0 : i32
    %c0_i32_0 = arith.constant 0 : i32
    %c0_i32_1 = arith.constant 0 : i32
    return %arg0, %c0_i32, %c0_i32_0 : i32, i32, i32
  }
  func.func @transform_2(%arg0: i32, %arg1: i32) -> (i32, i32, i32) {
    %c0_i32 = arith.constant 0 : i32
    %c0_i32_0 = arith.constant 0 : i32
    %c0_i32_1 = arith.constant 0 : i32
    return %arg1, %c0_i32, %c0_i32_0 : i32, i32, i32
  }
  func.func @transform_3(%arg0: i32, %arg1: i32) -> (i32, i32, i32) {
    %c0_i32 = arith.constant 0 : i32
    %c0_i32_0 = arith.constant 0 : i32
    %c0_i32_1 = arith.constant 0 : i32
    return %arg1, %c0_i32, %c0_i32_0 : i32, i32, i32
  }
  func.func @transform_4(%arg0: i32, %arg1: i32) -> (i32, i32, i32) {
    %c0_i32 = arith.constant 0 : i32
    %c0_i32_0 = arith.constant 0 : i32
    %c0_i32_1 = arith.constant 0 : i32
    return %arg1, %c0_i32, %c0_i32_0 : i32, i32, i32
  }
  func.func @transform_5(%arg0: i32, %arg1: i32) -> (i32, i32, i32) {
    %c0_i32 = arith.constant 0 : i32
    %c0_i32_0 = arith.constant 0 : i32
    %c0_i32_1 = arith.constant 0 : i32
    return %arg1, %c0_i32, %c0_i32_0 : i32, i32, i32
  }
  func.func @transform_6(%arg0: i32, %arg1: i32) -> (i32, i32, i32) {
    %c0_i32 = arith.constant 0 : i32
    %c0_i32_0 = arith.constant 0 : i32
    %c0_i32_1 = arith.constant 0 : i32
    return %arg1, %c0_i32, %c0_i32_0 : i32, i32, i32
  }
  func.func @transform_7(%arg0: i32, %arg1: i32) -> (i32, i32) {
    %c0_i32 = arith.constant 0 : i32
    %c0_i32_0 = arith.constant 0 : i32
    return %arg0, %c0_i32 : i32, i32
  }
}

</mosaic_0001>

<llo_original>
// kernel: tpu_custom_call.1
$region0: #{tpu_custom_call.1}
  #allocation0 [shape = 'u32[]', space=smem, size = 0x4, offset = 0x4, fixed_abs, tag = 'smem constant byte address 0x4 - core index']
  #allocation1 [shape = 'u32[72,128]{1,0:T(1,128)}', space=vmem, size = 0x9000, scoped, tag = 'internal scratch']
  #allocation2 [shape = 'f32[8,128]{1,0:T(8,128)}', space=vmem, size = 0x1000, scoped, tag = 'scratch operand']
  %s0 = inlined_call_operand.hbm [shape: f32[16,128], index: 0, kind: input, shape index: {}]
  %s1 = inlined_call_operand.hbm [shape: f32[2,8,8], index: 1, kind: input, shape index: {}]
  %s2 = inlined_call_operand.hbm [shape: bf16[2,128,384], index: 2, kind: input, shape index: {}]
  %s3 = inlined_call_operand.hbm [shape: bf16[2,128,128], index: 3, kind: input, shape index: {}]
  %s4 = inlined_call_operand.hbm [shape: bf16[2,128,256], index: 4, kind: input, shape index: {}]
  %s5 = inlined_call_operand.hbm [shape: bf16[2,256,128], index: 5, kind: input, shape index: {}]
  %s6 = inlined_call_operand.hbm [shape: f32[2,8,384], index: 6, kind: input, shape index: {}]
  %s7 = inlined_call_operand.hbm [shape: f32[16,128], index: 7, kind: output, shape index: {}]
  %s8 = sld [smem:[#allocation0]]
  $region97: #{tpu_custom_call.1} parent=0
    _
  %s10 = ssub.s32 1, %s8
  %s11 = scalar_select 0, %s10, %s8
  $region1: #{tpu_custom_call.1} parent=0
    #allocation3 [shape = 'u8[8192]{0}', space=vmem, size = 0x2000, scoped, tag = 'input window, operand 0']
    #allocation4 [shape = 's32[2]{0}', space=sflag, size = 0x8, scoped, tag = 'scoped memory for tpu_custom_call.1']
    #allocation5 [shape = 's32[2]{0}', space=sflag, size = 0x8, scoped, tag = 'scoped memory for tpu_custom_call.1']
    #allocation6 [shape = 'u8[8192]{0}', space=vmem, size = 0x2000, scoped, tag = 'input window, operand 1']
    #allocation7 [shape = 's32[2]{0}', space=sflag, size = 0x8, scoped, tag = 'scoped memory for tpu_custom_call.1']
    #allocation8 [shape = 'u8[196608]{0}', space=vmem, size = 0x30000, scoped, tag = 'input window, operand 2']
    #allocation9 [shape = 'u8[65536]{0}', space=vmem, size = 0x10000, scoped, tag = 'input window, operand 3']
    #allocation10 [shape = 's32[2]{0}', space=sflag, size = 0x8, scoped, tag = 'scoped memory for tpu_custom_call.1']
    #allocation11 [shape = 'u8[131072]{0}', space=vmem, size = 0x20000, scoped, tag = 'input window, operand 4']
    #allocation12 [shape = 'u8[131072]{0}', space=vmem, size = 0x20000, scoped, tag = 'input window, operand 5']
    #allocation13 [shape = 's32[2]{0}', space=sflag, size = 0x8, scoped, tag = 'scoped memory for tpu_custom_call.1']
    #allocation14 [shape = 'u8[24576]{0}', space=vmem, size = 0x6000, scoped, tag = 'input window, operand 6']
    #allocation15 [shape = 'u8[8192]{0}', space=vmem, size = 0x2000, scoped, tag = 'output window, operand 0']
    %12 = vsyncpa [#allocation4], 0
    %s13 = scalar_lea.sflag [#allocation4], 1
    %14 = vsyncpa %s13, 0
    %15 = vsyncpa [#allocation7], 0
    %s16 = scalar_lea.sflag [#allocation7], 1
    %17 = vsyncpa %s16, 0
    %18 = vsyncpa [#allocation10], 0
    %s19 = scalar_lea.sflag [#allocation10], 1
    %20 = vsyncpa %s19, 0
    %21 = vsyncpa [#allocation13], 0
    %s22 = scalar_lea.sflag [#allocation13], 1
    %23 = vsyncpa %s22, 0
    %24 = vsyncpa [#allocation5], 0
    %s25 = scalar_lea.sflag [#allocation5], 1
    %26 = vsyncpa %s25, 0
    loop: start=0, step=1, limit=6
    $region2: #{tpu_custom_call.1} parent=1 // loop_pre_header
      _
    $region3: #{tpu_custom_call.1} parent=1 // loop_header
      %s28 = sphi 0, %s32
      %p29 = scmp.ge.s32.totalorder %s28, 6
      %s35 = sphi 0, %s47
      %s36 = sphi 0, %s43
      %s37 = sphi 0, %s35
      %s38 = sphi 0, %s36
      %s39 = sphi 0, %s37
      %s40 = sphi 0, %s38
      %s50 = sphi 0, %s52
      %s53 = sphi 0, %s50
      %s54 = sphi 0, %s53
      %s70 = sphi 0, %s54
      %s76 = sphi 0, %s78
      %s79 = sphi 0, %s76
      %s80 = sphi 0, %s79
      %s96 = sphi 0, %s80
      %s102 = sphi 0, %s104
      %s105 = sphi 0, %s102
      %s106 = sphi 0, %s105
      %s122 = sphi 0, %s106
      %s128 = sphi 0, %s130
      %s131 = sphi 0, %s128
      %s132 = sphi 0, %s131
      %s148 = sphi 0, %s132
      %s154 = sphi 0, %s156
      %s157 = sphi 0, %s154
      %s158 = sphi 0, %s157
      %s174 = sphi 0, %s158
      %s180 = sphi 0, %s182
      %s183 = sphi 0, %s180
      %s184 = sphi 0, %s183
      %s200 = sphi 0, %s184
      %s206 = sphi 0, %s208
      %s209 = sphi 0, %s206
      %s210 = sphi 0, %s209
      %s226 = sphi 0, %s210
      %s232 = sphi 0, %s234
      %s235 = sphi 0, %s232
      %s236 = sphi 0, %s235
      %s252 = sphi 0, %s236
    $region4: #{tpu_custom_call.1} parent=1 // loop_header_branch
      %31 = sbr.rel (%p29) target = $region8
    $region5: #{tpu_custom_call.1} parent=1 // loop_body
      %s33 = ssub.s32 %s28, 1
      %s34 = ssub.s32 %s28, 2
      %s41 = sadd.s32 1, %s36
      %p42 = scmp.ge.s32.totalorder %s41, 2
      %s43 = scalar_select %p42, 0, %s41
      %s44 = sadd.s32 1, %s35
      %s45 = scalar_select %p42, %s44, %s35
      %p46 = scmp.ge.s32.totalorder %s45, 2
      %s47 = scalar_select %p46, 0, %s45
      %s48 = ssub.s32 %s35, %s47
      %p49 = scmp.eq.s32.totalorder %s48, 0
      %s51 = sadd.s32 %s50, 1
      %s52 = scalar_select %p49, %s50, %s51
      %p55 = pneg %p49
      %p56 = scmp.eq.s32.totalorder %s28, 3
      %p57 = por %p55, %p56
      %p58 = scmp.ne.s32.totalorder %s50, %s53
      %p59 = scmp.eq.s32.totalorder %s28, 0
      %p60 = por %p58, %p59
      %p61 = scmp.ne.s32.totalorder %s50, %s53
      %p62 = scmp.eq.s32.totalorder %s33, 3
      %p63 = por %p61, %p62
      %p64 = scmp.ne.s32.totalorder %s53, %s54
      %p65 = scmp.eq.s32.totalorder %s33, 0
      %p66 = por %p64, %p65
      %p67 = scmp.ne.s32.totalorder %s53, %s54
      %p68 = scmp.eq.s32.totalorder %s34, 3
      %p69 = por %p67, %p68
      %p71 = scmp.ne.s32.totalorder %s54, %s70
      %p72 = scmp.eq.s32.totalorder %s34, 0
      %p73 = por %p71, %p72
      %s74 = ssub.s32 %s35, %s47
      %p75 = scmp.eq.s32.totalorder %s74, 0
      %s77 = sadd.s32 %s76, 1
      %s78 = scalar_select %p75, %s76, %s77
      %p81 = pneg %p75
      %p82 = scmp.eq.s32.totalorder %s28, 3
      %p83 = por %p81, %p82
      %p84 = scmp.ne.s32.totalorder %s76, %s79
      %p85 = scmp.eq.s32.totalorder %s28, 0
      %p86 = por %p84, %p85
      %p87 = scmp.ne.s32.totalorder %s76, %s79
      %p88 = scmp.eq.s32.totalorder %s33, 3
      %p89 = por %p87, %p88
      %p90 = scmp.ne.s32.totalorder %s79, %s80
      %p91 = scmp.eq.s32.totalorder %s33, 0
      %p92 = por %p90, %p91
      %p93 = scmp.ne.s32.totalorder %s79, %s80
      %p94 = scmp.eq.s32.totalorder %s34, 3
      %p95 = por %p93, %p94
      %p97 = scmp.ne.s32.totalorder %s80, %s96
      %p98 = scmp.eq.s32.totalorder %s34, 0
      %p99 = por %p97, %p98
      %s100 = ssub.s32 %s36, %s43
      %p101 = scmp.eq.s32.totalorder %s100, 0
      %s103 = sadd.s32 %s102, 1
      %s104 = scalar_select %p101, %s102, %s103
      %p107 = pneg %p101
      %p108 = scmp.eq.s32.totalorder %s28, 3
      %p109 = por %p107, %p108
      %p110 = scmp.ne.s32.totalorder %s102, %s105
      %p111 = scmp.eq.s32.totalorder %s28, 0
      %p112 = por %p110, %p111
      %p113 = scmp.ne.s32.totalorder %s102, %s105
      %p114 = scmp.eq.s32.totalorder %s33, 3
      %p115 = por %p113, %p114
      %p116 = scmp.ne.s32.totalorder %s105, %s106
      %p117 = scmp.eq.s32.totalorder %s33, 0
      %p118 = por %p116, %p117
      %p119 = scmp.ne.s32.totalorder %s105, %s106
      %p120 = scmp.eq.s32.totalorder %s34, 3
      %p121 = por %p119, %p120
      %p123 = scmp.ne.s32.totalorder %s106, %s122
      %p124 = scmp.eq.s32.totalorder %s34, 0
      %p125 = por %p123, %p124
      %s126 = ssub.s32 %s36, %s43
      %p127 = scmp.eq.s32.totalorder %s126, 0
      %s129 = sadd.s32 %s128, 1
      %s130 = scalar_select %p127, %s128, %s129
      %p133 = pneg %p127
      %p134 = scmp.eq.s32.totalorder %s28, 3
      %p135 = por %p133, %p134
      %p136 = scmp.ne.s32.totalorder %s128, %s131
      %p137 = scmp.eq.s32.totalorder %s28, 0
      %p138 = por %p136, %p137
      %p139 = scmp.ne.s32.totalorder %s128, %s131
      %p140 = scmp.eq.s32.totalorder %s33, 3
      %p141 = por %p139, %p140
      %p142 = scmp.ne.s32.totalorder %s131, %s132
      %p143 = scmp.eq.s32.totalorder %s33, 0
      %p144 = por %p142, %p143
      %p145 = scmp.ne.s32.totalorder %s131, %s132
      %p146 = scmp.eq.s32.totalorder %s34, 3
      %p147 = por %p145, %p146
      %p149 = scmp.ne.s32.totalorder %s132, %s148
      %p150 = scmp.eq.s32.totalorder %s34, 0
      %p151 = por %p149, %p150
      %s152 = ssub.s32 %s36, %s43
      %p153 = scmp.eq.s32.totalorder %s152, 0
      %s155 = sadd.s32 %s154, 1
      %s156 = scalar_select %p153, %s154, %s155
      %p159 = pneg %p153
      %p160 = scmp.eq.s32.totalorder %s28, 3
      %p161 = por %p159, %p160
      %p162 = scmp.ne.s32.totalorder %s154, %s157
      %p163 = scmp.eq.s32.totalorder %s28, 0
      %p164 = por %p162, %p163
      %p165 = scmp.ne.s32.totalorder %s154, %s157
      %p166 = scmp.eq.s32.totalorder %s33, 3
      %p167 = por %p165, %p166
      %p168 = scmp.ne.s32.totalorder %s157, %s158
      %p169 = scmp.eq.s32.totalorder %s33, 0
      %p170 = por %p168, %p169
      %p171 = scmp.ne.s32.totalorder %s157, %s158
      %p172 = scmp.eq.s32.totalorder %s34, 3
      %p173 = por %p171, %p172
      %p175 = scmp.ne.s32.totalorder %s158, %s174
      %p176 = scmp.eq.s32.totalorder %s34, 0
      %p177 = por %p175, %p176
      %s178 = ssub.s32 %s36, %s43
      %p179 = scmp.eq.s32.totalorder %s178, 0
      %s181 = sadd.s32 %s180, 1
      %s182 = scalar_select %p179, %s180, %s181
      %p185 = pneg %p179
      %p186 = scmp.eq.s32.totalorder %s28, 3
      %p187 = por %p185, %p186
      %p188 = scmp.ne.s32.totalorder %s180, %s183
      %p189 = scmp.eq.s32.totalorder %s28, 0
      %p190 = por %p188, %p189
      %p191 = scmp.ne.s32.totalorder %s180, %s183
      %p192 = scmp.eq.s32.totalorder %s33, 3
      %p193 = por %p191, %p192
      %p194 = scmp.ne.s32.totalorder %s183, %s184
      %p195 = scmp.eq.s32.totalorder %s33, 0
      %p196 = por %p194, %p195
      %p197 = scmp.ne.s32.totalorder %s183, %s184
      %p198 = scmp.eq.s32.totalorder %s34, 3
      %p199 = por %p197, %p198
      %p201 = scmp.ne.s32.totalorder %s184, %s200
      %p202 = scmp.eq.s32.totalorder %s34, 0
      %p203 = por %p201, %p202
      %s204 = ssub.s32 %s36, %s43
      %p205 = scmp.eq.s32.totalorder %s204, 0
      %s207 = sadd.s32 %s206, 1
      %s208 = scalar_select %p205, %s206, %s207
      %p211 = pneg %p205
      %p212 = scmp.eq.s32.totalorder %s28, 3
      %p213 = por %p211, %p212
      %p214 = scmp.ne.s32.totalorder %s206, %s209
      %p215 = scmp.eq.s32.totalorder %s28, 0
      %p216 = por %p214, %p215
      %p217 = scmp.ne.s32.totalorder %s206, %s209
      %p218 = scmp.eq.s32.totalorder %s33, 3
      %p219 = por %p217, %p218
      %p220 = scmp.ne.s32.totalorder %s209, %s210
      %p221 = scmp.eq.s32.totalorder %s33, 0
      %p222 = por %p220, %p221
      %p223 = scmp.ne.s32.totalorder %s209, %s210
      %p224 = scmp.eq.s32.totalorder %s34, 3
      %p225 = por %p223, %p224
      %p227 = scmp.ne.s32.totalorder %s210, %s226
      %p228 = scmp.eq.s32.totalorder %s34, 0
      %p229 = por %p227, %p228
      %s230 = ssub.s32 %s35, %s47
      %p231 = scmp.eq.s32.totalorder %s230, 0
      %s233 = sadd.s32 %s232, 1
      %s234 = scalar_select %p231, %s232, %s233
      %p237 = pneg %p231
      %p238 = scmp.eq.s32.totalorder %s28, 3
      %p239 = por %p237, %p238
      %p240 = scmp.ne.s32.totalorder %s232, %s235
      %p241 = scmp.eq.s32.totalorder %s28, 0
      %p242 = por %p240, %p241
      %p243 = scmp.ne.s32.totalorder %s232, %s235
      %p244 = scmp.eq.s32.totalorder %s33, 3
      %p245 = por %p243, %p244
      %p246 = scmp.ne.s32.totalorder %s235, %s236
      %p247 = scmp.eq.s32.totalorder %s33, 0
      %p248 = por %p246, %p247
      %p249 = scmp.ne.s32.totalorder %s235, %s236
      %p250 = scmp.eq.s32.totalorder %s34, 3
      %p251 = por %p249, %p250
      %p253 = scmp.ne.s32.totalorder %s236, %s252
      %p254 = scmp.eq.s32.totalorder %s34, 0
      %p255 = por %p253, %p254
      %p256 = scmp.le.s32.totalorder 1, %s28
      %p257 = scmp.lt.s32.totalorder %s28, 5
      %p258 = pnand %p256, %p257
      %p259 = pneg %p258
      // Predicated region
      $region9: #{tpu_custom_call.1} parent=5 // pred_check
        _
      $region10: #{tpu_custom_call.1} parent=5 // pred_check_branch
        %261 = sbr.rel (%p258) target = $region12
      $region11: #{tpu_custom_call.1} parent=5 // pred_region
        %s262 = ssub.s32 %s28, 1
      $region12: #{tpu_custom_call.1} parent=5 // pred_fallthru
        _
      %p263 = scmp.lt.s32.totalorder %s28, 4
      // Predicated region
      $region13: #{tpu_custom_call.1} parent=5 // pred_check
        %p264 = pneg %p263
      $region14: #{tpu_custom_call.1} parent=5 // pred_check_branch
        %266 = sbr.rel (%p264) target = $region16
      $region15: #{tpu_custom_call.1} parent=5 // pred_region
        // Predicated region
        $region17: #{tpu_custom_call.1} parent=15 // pred_check
          %p267 = pneg %p60
        $region18: #{tpu_custom_call.1} parent=15 // pred_check_branch
          %269 = sbr.rel (%p267) target = $region20
        $region19: #{tpu_custom_call.1} parent=15 // pred_region
          %s270 = sand.u32 %s50, 1
          %s271 = scalar_lea.sflag [#allocation4], %s270
          %s272 = sand.u32 %s50, 1
          %s273 = smul.addr %s272, 8
          %s274 = scalar_lea.vmem [#allocation3], %s273
          %276 = vsyncadd %s271, 0
          %s277 = smul.addr %s35, 8
          %s278 = scalar_lea.hbm %s0, %s277
          %s280 = sshll.u32 %s278, 4
          %s281 = int_to_ptr.hbm [resolvable:$true] %s280
          %s282 = sshll.u32 %s274, 4
          %s283 = int_to_ptr.vmem [resolvable:$true] %s282
          %285 = dma.hbm_to_vmem [thread:$0]  %s281, 128, %s283, %s271
        $region20: #{tpu_custom_call.1} parent=15 // pred_fallthru
          _
        // Predicated region
        $region21: #{tpu_custom_call.1} parent=15 // pred_check
          %p286 = pneg %p86
        $region22: #{tpu_custom_call.1} parent=15 // pred_check_branch
          %288 = sbr.rel (%p286) target = $region24
        $region23: #{tpu_custom_call.1} parent=15 // pred_region
          %s289 = sand.u32 %s28, 1
          %s290 = scalar_lea.sflag [#allocation7], %s289
          %s291 = sand.u32 %s76, 1
          %s292 = smul.addr %s291, 8
          %s293 = scalar_lea.vmem [#allocation6], %s292
          %295 = vsyncadd %s290, 0
          %s296 = smul.addr %s35, 8
          %s297 = scalar_lea.hbm %s1, %s296
          %s299 = sshll.u32 %s297, 4
          %s300 = int_to_ptr.hbm [resolvable:$true] %s299
          %s301 = sshll.u32 %s293, 4
          %s302 = int_to_ptr.vmem [resolvable:$true] %s301
          %304 = dma.hbm_to_vmem [thread:$0]  %s300, 128, %s302, %s290
        $region24: #{tpu_custom_call.1} parent=15 // pred_fallthru
          _
        // Predicated region
        $region25: #{tpu_custom_call.1} parent=15 // pred_check
          %p305 = pneg %p112
        $region26: #{tpu_custom_call.1} parent=15 // pred_check_branch
          %307 = sbr.rel (%p305) target = $region28
        $region27: #{tpu_custom_call.1} parent=15 // pred_region
          %s308 = sand.u32 %s28, 1
          %s309 = scalar_lea.sflag [#allocation7], %s308
          %s310 = sand.u32 %s102, 1
          %s311 = smul.addr %s310, 192
          %s312 = scalar_lea.vmem [#allocation8], %s311
          %314 = vsyncadd %s309, 0
          %s315 = smul.addr %s36, 48
          %s316 = smul.addr %s315, 4
          %s317 = scalar_lea.hbm %s2, %s316
          %s318 = sshll.u32 %s317, 4
          %s319 = int_to_ptr.hbm [resolvable:$true] %s318
          %s320 = sshll.u32 %s312, 4
          %s321 = int_to_ptr.vmem [resolvable:$true] %s320
          %326 = dma.hbm_to_vmem [thread:$0]  %s319, 3072, %s321, %s309, 192, 192, 12
        $region28: #{tpu_custom_call.1} parent=15 // pred_fallthru
          _
        // Predicated region
        $region29: #{tpu_custom_call.1} parent=15 // pred_check
          %p327 = pneg %p138
        $region30: #{tpu_custom_call.1} parent=15 // pred_check_branch
          %329 = sbr.rel (%p327) target = $region32
        $region31: #{tpu_custom_call.1} parent=15 // pred_region
          %s330 = sand.u32 %s28, 1
          %s331 = scalar_lea.sflag [#allocation10], %s330
          %s332 = sand.u32 %s128, 1
          %s333 = smul.addr %s332, 64
          %s334 = scalar_lea.vmem [#allocation9], %s333
          %336 = vsyncadd %s331, 0
          %s337 = smul.addr %s36, 16
          %s338 = smul.addr %s337, 4
          %s339 = scalar_lea.hbm %s3, %s338
          %s340 = sshll.u32 %s339, 4
          %s341 = int_to_ptr.hbm [resolvable:$true] %s340
          %s342 = sshll.u32 %s334, 4
          %s343 = int_to_ptr.vmem [resolvable:$true] %s342
          %348 = dma.hbm_to_vmem [thread:$0]  %s341, 1024, %s343, %s331, 64, 64, 4
        $region32: #{tpu_custom_call.1} parent=15 // pred_fallthru
          _
        // Predicated region
        $region33: #{tpu_custom_call.1} parent=15 // pred_check
          %p349 = pneg %p164
        $region34: #{tpu_custom_call.1} parent=15 // pred_check_branch
          %351 = sbr.rel (%p349) target = $region36
        $region35: #{tpu_custom_call.1} parent=15 // pred_region
          %s352 = sand.u32 %s28, 1
          %s353 = scalar_lea.sflag [#allocation10], %s352
          %s354 = sand.u32 %s154, 1
          %s355 = smul.addr %s354, 128
          %s356 = scalar_lea.vmem [#allocation11], %s355
          %358 = vsyncadd %s353, 0
          %s359 = smul.addr %s36, 32
          %s360 = smul.addr %s359, 4
          %s361 = scalar_lea.hbm %s4, %s360
          %s362 = sshll.u32 %s361, 4
          %s363 = int_to_ptr.hbm [resolvable:$true] %s362
          %s364 = sshll.u32 %s356, 4
          %s365 = int_to_ptr.vmem [resolvable:$true] %s364
          %370 = dma.hbm_to_vmem [thread:$0]  %s363, 2048, %s365, %s353, 128, 128, 8
        $region36: #{tpu_custom_call.1} parent=15 // pred_fallthru
          _
        // Predicated region
        $region37: #{tpu_custom_call.1} parent=15 // pred_check
          %p371 = pneg %p190
        $region38: #{tpu_custom_call.1} parent=15 // pred_check_branch
          %373 = sbr.rel (%p371) target = $region40
        $region39: #{tpu_custom_call.1} parent=15 // pred_region
          %s374 = sand.u32 %s28, 1
          %s375 = scalar_lea.sflag [#allocation13], %s374
          %s376 = sand.u32 %s180, 1
          %s377 = smul.addr %s376, 128
          %s378 = scalar_lea.vmem [#allocation12], %s377
          %380 = vsyncadd %s375, 0
          %s381 = smul.addr %s36, 32
          %s382 = smul.addr %s381, 4
          %s383 = scalar_lea.hbm %s5, %s382
          %s384 = sshll.u32 %s383, 4
          %s385 = int_to_ptr.hbm [resolvable:$true] %s384
          %s386 = sshll.u32 %s378, 4
          %s387 = int_to_ptr.vmem [resolvable:$true] %s386
          %392 = dma.hbm_to_vmem [thread:$0]  %s385, 2048, %s387, %s375, 64, 64, 4
        $region40: #{tpu_custom_call.1} parent=15 // pred_fallthru
          _
        // Predicated region
        $region41: #{tpu_custom_call.1} parent=15 // pred_check
          %p393 = pneg %p216
        $region42: #{tpu_custom_call.1} parent=15 // pred_check_branch
          %395 = sbr.rel (%p393) target = $region44
        $region43: #{tpu_custom_call.1} parent=15 // pred_region
          %s396 = sand.u32 %s28, 1
          %s397 = scalar_lea.sflag [#allocation13], %s396
          %s398 = sand.u32 %s206, 1
          %s399 = smul.addr %s398, 24
          %s400 = scalar_lea.vmem [#allocation14], %s399
          %402 = vsyncadd %s397, 0
          %s403 = smul.addr %s36, 3
          %s404 = smul.addr %s403, 8
          %s405 = scalar_lea.hbm %s6, %s404
          %s407 = sshll.u32 %s405, 4
          %s408 = int_to_ptr.hbm [resolvable:$true] %s407
          %s409 = sshll.u32 %s400, 4
          %s410 = int_to_ptr.vmem [resolvable:$true] %s409
          %412 = dma.hbm_to_vmem [thread:$0]  %s408, 384, %s410, %s397
        $region44: #{tpu_custom_call.1} parent=15 // pred_fallthru
          _
      $region16: #{tpu_custom_call.1} parent=5 // pred_fallthru
        _
      %p413 = scmp.le.s32.totalorder 1, %s28
      %p414 = scmp.lt.s32.totalorder %s28, 5
      %p415 = pnand %p413, %p414
      %p416 = pneg %p415
      // Predicated region
      $region45: #{tpu_custom_call.1} parent=5 // pred_check
        _
      $region46: #{tpu_custom_call.1} parent=5 // pred_check_branch
        %418 = sbr.rel (%p415) target = $region48
      $region47: #{tpu_custom_call.1} parent=5 // pred_region
        %s419 = ssub.s32 %s28, 1
        %s420 = sand.u32 %s53, 1
        %s421 = scalar_lea.sflag [#allocation4], %s420
        %s422 = sand.u32 %s53, 1
        %s423 = smul.addr %s422, 8
        %s424 = scalar_lea.vmem [#allocation3], %s423
        // Predicated region
        $region49: #{tpu_custom_call.1} parent=47 // pred_check
          %p425 = pneg %p66
        $region50: #{tpu_custom_call.1} parent=47 // pred_check_branch
          %427 = sbr.rel (%p425) target = $region52
        $region51: #{tpu_custom_call.1} parent=47 // pred_region
          %429 = dma.done %s421, 128
        $region52: #{tpu_custom_call.1} parent=47 // pred_fallthru
          _
        %s430 = sand.u32 %s33, 1
        %s431 = scalar_lea.sflag [#allocation7], %s430
        %s432 = sand.u32 %s79, 1
        %s433 = smul.addr %s432, 8
        %s434 = scalar_lea.vmem [#allocation6], %s433
        // Predicated region
        $region53: #{tpu_custom_call.1} parent=47 // pred_check
          %p435 = pneg %p92
        $region54: #{tpu_custom_call.1} parent=47 // pred_check_branch
          %437 = sbr.rel (%p435) target = $region56
        $region55: #{tpu_custom_call.1} parent=47 // pred_region
          %439 = dma.done %s431, 128
        $region56: #{tpu_custom_call.1} parent=47 // pred_fallthru
          _
        %s440 = sand.u32 %s33, 1
        %s441 = scalar_lea.sflag [#allocation7], %s440
        %s442 = sand.u32 %s105, 1
        %s443 = smul.addr %s442, 192
        %s444 = scalar_lea.vmem [#allocation8], %s443
        // Predicated region
        $region57: #{tpu_custom_call.1} parent=47 // pred_check
          %p445 = pneg %p118
        $region58: #{tpu_custom_call.1} parent=47 // pred_check_branch
          %447 = sbr.rel (%p445) target = $region60
        $region59: #{tpu_custom_call.1} parent=47 // pred_region
          %449 = dma.done %s441, 3072
        $region60: #{tpu_custom_call.1} parent=47 // pred_fallthru
          _
        %s450 = sand.u32 %s33, 1
        %s451 = scalar_lea.sflag [#allocation10], %s450
        %s452 = sand.u32 %s131, 1
        %s453 = smul.addr %s452, 64
        %s454 = scalar_lea.vmem [#allocation9], %s453
        // Predicated region
        $region61: #{tpu_custom_call.1} parent=47 // pred_check
          %p455 = pneg %p144
        $region62: #{tpu_custom_call.1} parent=47 // pred_check_branch
          %457 = sbr.rel (%p455) target = $region64
        $region63: #{tpu_custom_call.1} parent=47 // pred_region
          %459 = dma.done %s451, 1024
        $region64: #{tpu_custom_call.1} parent=47 // pred_fallthru
          _
        %s460 = sand.u32 %s33, 1
        %s461 = scalar_lea.sflag [#allocation10], %s460
        %s462 = sand.u32 %s157, 1
        %s463 = smul.addr %s462, 128
        %s464 = scalar_lea.vmem [#allocation11], %s463
        // Predicated region
        $region65: #{tpu_custom_call.1} parent=47 // pred_check
          %p465 = pneg %p170
        $region66: #{tpu_custom_call.1} parent=47 // pred_check_branch
          %467 = sbr.rel (%p465) target = $region68
        $region67: #{tpu_custom_call.1} parent=47 // pred_region
          %469 = dma.done %s461, 2048
        $region68: #{tpu_custom_call.1} parent=47 // pred_fallthru
          _
        %s470 = sand.u32 %s33, 1
        %s471 = scalar_lea.sflag [#allocation13], %s470
        %s472 = sand.u32 %s183, 1
        %s473 = smul.addr %s472, 128
        %s474 = scalar_lea.vmem [#allocation12], %s473
        // Predicated region
        $region69: #{tpu_custom_call.1} parent=47 // pred_check
          %p475 = pneg %p196
        $region70: #{tpu_custom_call.1} parent=47 // pred_check_branch
          %477 = sbr.rel (%p475) target = $region72
        $region71: #{tpu_custom_call.1} parent=47 // pred_region
          %479 = dma.done %s471, 2048
        $region72: #{tpu_custom_call.1} parent=47 // pred_fallthru
          _
        %s480 = sand.u32 %s33, 1
        %s481 = scalar_lea.sflag [#allocation13], %s480
        %s482 = sand.u32 %s209, 1
        %s483 = smul.addr %s482, 24
        %s484 = scalar_lea.vmem [#allocation14], %s483
        // Predicated region
        $region73: #{tpu_custom_call.1} parent=47 // pred_check
          %p485 = pneg %p222
        $region74: #{tpu_custom_call.1} parent=47 // pred_check_branch
          %487 = sbr.rel (%p485) target = $region76
        $region75: #{tpu_custom_call.1} parent=47 // pred_region
          %489 = dma.done %s481, 384
        $region76: #{tpu_custom_call.1} parent=47 // pred_fallthru
          _
        %s490 = sand.u32 %s53, 1
        %s491 = scalar_lea.sflag [#allocation4], %s490
        %s492 = sand.u32 %s53, 1
        %s493 = smul.addr %s492, 8
        %s494 = scalar_lea.vmem [#allocation3], %s493
        %p495 = pneg %p66
        %p496 = pneg %p63
        %s497 = sand.u32 %s33, 1
        %s498 = scalar_lea.sflag [#allocation7], %s497
        %s499 = sand.u32 %s79, 1
        %s500 = smul.addr %s499, 8
        %s501 = scalar_lea.vmem [#allocation6], %s500
        %p502 = pneg %p92
        %p503 = pneg %p89
        %s504 = sand.u32 %s33, 1
        %s505 = scalar_lea.sflag [#allocation7], %s504
        %s506 = sand.u32 %s105, 1
        %s507 = smul.addr %s506, 192
        %s508 = scalar_lea.vmem [#allocation8], %s507
        %p509 = pneg %p118
        %p510 = pneg %p115
        %s511 = sand.u32 %s33, 1
        %s512 = scalar_lea.sflag [#allocation10], %s511
        %s513 = sand.u32 %s131, 1
        %s514 = smul.addr %s513, 64
        %s515 = scalar_lea.vmem [#allocation9], %s514
        %p516 = pneg %p144
        %p517 = pneg %p141
        %s518 = sand.u32 %s33, 1
        %s519 = scalar_lea.sflag [#allocation10], %s518
        %s520 = sand.u32 %s157, 1
        %s521 = smul.addr %s520, 128
        %s522 = scalar_lea.vmem [#allocation11], %s521
        %p523 = pneg %p170
        %p524 = pneg %p167
        %s525 = sand.u32 %s33, 1
        %s526 = scalar_lea.sflag [#allocation13], %s525
        %s527 = sand.u32 %s183, 1
        %s528 = smul.addr %s527, 128
        %s529 = scalar_lea.vmem [#allocation12], %s528
        %p530 = pneg %p196
        %p531 = pneg %p193
        %s532 = sand.u32 %s33, 1
        %s533 = scalar_lea.sflag [#allocation13], %s532
        %s534 = sand.u32 %s209, 1
        %s535 = smul.addr %s534, 24
        %s536 = scalar_lea.vmem [#allocation14], %s535
        %p537 = pneg %p222
        %p538 = pneg %p219
        %p539 = pneg %p248
        %p540 = pneg %p245
        %s541 = sand.u32 %s235, 1
        %s542 = scalar_lea.sflag [#allocation5], %s541
        %s543 = sand.u32 %s235, 1
        %s544 = smul.addr %s543, 8
        %s545 = scalar_lea.vmem [#allocation15], %s544
        %p547 = scmp.eq.s32.totalorder %s38, 0
        // Predicated region
        $region77: #{tpu_custom_call.1} parent=47 // pred_check
          %p548 = pneg %p547
        $region78: #{tpu_custom_call.1} parent=47 // pred_check_branch
          %550 = sbr.rel (%p548) target = $region80
        $region79: #{tpu_custom_call.1} parent=47 // pred_region
          %v551 = vld [vmem:[%s424] sm:$0xff]
          %552 = vst [vmem:[#allocation2] sm:$0xff] %v551
        $region80: #{tpu_custom_call.1} parent=47 // pred_fallthru
          _
        %v553 = vld [vmem:[#allocation2] sm:$0xff]
        %v554 = vld [vmem:[%s484] sm:$0xff]
        %v555 = vld [vmem:[%s484 + $0x8] sm:$0xff]
        %v556 = vld [vmem:[%s484 + $0x10] sm:$0xff]
        %557 = vadd.xlane.f32.xlu0 %v553
        %v558 = vpop.xlane.xlu0 %557
        %v559 = vrcp.pop 128.0
        %v560 = vmul.f32 128.0, %v559
        %v561 = vsub.f32 1.0, %v560
        %v562 = vmul.f32 %v559, %v561
        %v563 = vadd.f32 %v559, %v562
        %vm564 = vweird.f32 %v559
        %v565 = vsel %vm564, %v559, %v563
        %v566 = vmul.f32 %v558, %v565
        %v567 = vsub.f32 %v553, %v566
        %v568 = vmul.f32 %v567, %v567
        %569 = vadd.xlane.f32.xlu0 %v568
        %v570 = vpop.xlane.xlu0 %569
        %v571 = vmul.f32 %v570, %v565
        %v572 = vadd.f32 %v571, 1e-05
        %v573 = vrsqrt.pop %v572
        %v574 = vmul.f32 %v573, %v572
        %v575 = vmul.f32 %v574, %v573
        %v576 = vmul.f32 0.5, %v575
        %v577 = vsub.f32 1.5, %v576
        %v578 = vmul.f32 %v573, %v577
        %vm579 = vweird.f32 %v572
        %vm580 = vweird.f32 %v573
        %vm581 = vmor %vm579, %vm580
        %v582 = vsel %vm581, %v573, %v578
        %v583 = vmul.f32 %v567, %v582
        %v584 = vperm.slane %v554, 0
        %v585 = vmul.f32 %v583, %v584
        %v586 = vperm.slane %v554, 1
        %v587 = vadd.f32 %v585, %v586
        %v588 = vpack.c.bf16 %v587, %v587
        %v589 = vld [vmem:[%s444] sm:$0xff]
        %v590 = vld [vmem:[%s444 + $0x8] sm:$0xf]
        %v591 = vld [vmem:[%s444 + $0xc] sm:$0xff]
        %v592 = vld [vmem:[%s444 + $0x14] sm:$0xf]
        %v593 = vld [vmem:[%s444 + $0x18] sm:$0xff]
        %v594 = vld [vmem:[%s444 + $0x20] sm:$0xf]
        %v595 = vld [vmem:[%s444 + $0x24] sm:$0xff]
        %v596 = vld [vmem:[%s444 + $0x2c] sm:$0xf]
        %v597 = vld [vmem:[%s444 + $0x30] sm:$0xff]
        %v598 = vld [vmem:[%s444 + $0x38] sm:$0xf]
        %v599 = vld [vmem:[%s444 + $0x3c] sm:$0xff]
        %v600 = vld [vmem:[%s444 + $0x44] sm:$0xf]
        %v601 = vld [vmem:[%s444 + $0x48] sm:$0xff]
        %v602 = vld [vmem:[%s444 + $0x50] sm:$0xf]
        %v603 = vld [vmem:[%s444 + $0x54] sm:$0xff]
        %v604 = vld [vmem:[%s444 + $0x5c] sm:$0xf]
        %v605 = vld [vmem:[%s444 + $0x60] sm:$0xff]
        %v606 = vld [vmem:[%s444 + $0x68] sm:$0xf]
        %v607 = vld [vmem:[%s444 + $0x6c] sm:$0xff]
        %v608 = vld [vmem:[%s444 + $0x74] sm:$0xf]
        %v609 = vld [vmem:[%s444 + $0x78] sm:$0xff]
        %v610 = vld [vmem:[%s444 + $0x80] sm:$0xf]
        %v611 = vld [vmem:[%s444 + $0x84] sm:$0xff]
        %v612 = vld [vmem:[%s444 + $0x8c] sm:$0xf]
        %v613 = vld [vmem:[%s444 + $0x90] sm:$0xff]
        %v614 = vld [vmem:[%s444 + $0x98] sm:$0xf]
        %v615 = vld [vmem:[%s444 + $0x9c] sm:$0xff]
        %v616 = vld [vmem:[%s444 + $0xa4] sm:$0xf]
        %v617 = vld [vmem:[%s444 + $0xa8] sm:$0xff]
        %v618 = vld [vmem:[%s444 + $0xb0] sm:$0xf]
        %v619 = vld [vmem:[%s444 + $0xb4] sm:$0xff]
        %v620 = vld [vmem:[%s444 + $0xbc] sm:$0xf]
        %v621 = vperm.slane %v554, 2
        %v622 = vperm.slane %v555, 2
        %v623 = vperm.slane %v556, 2
        %v656 = vunpack.c.l.b16 %v589
        %v657 = vunpack.c.h.b16 %v589
        %v658 = vunpack.c.l.b16 %v590
        %v659 = vunpack.c.l.b16 %v591
        %v660 = vunpack.c.h.b16 %v591
        %v661 = vunpack.c.l.b16 %v592
        %v662 = vunpack.c.l.b16 %v593
        %v663 = vunpack.c.h.b16 %v593
        %v664 = vunpack.c.l.b16 %v594
        %v665 = vunpack.c.l.b16 %v595
        %v666 = vunpack.c.h.b16 %v595
        %v667 = vunpack.c.l.b16 %v596
        %v668 = vunpack.c.l.b16 %v597
        %v669 = vunpack.c.h.b16 %v597
        %v670 = vunpack.c.l.b16 %v598
        %v671 = vunpack.c.l.b16 %v599
        %v672 = vunpack.c.h.b16 %v599
        %v673 = vunpack.c.l.b16 %v600
        %v674 = vunpack.c.l.b16 %v601
        %v675 = vunpack.c.h.b16 %v601
        %v676 = vunpack.c.l.b16 %v602
        %v677 = vunpack.c.l.b16 %v603
        %v678 = vunpack.c.h.b16 %v603
        %v679 = vunpack.c.l.b16 %v604
        %v680 = vunpack.c.l.b16 %v605
        %v681 = vunpack.c.h.b16 %v605
        %v682 = vunpack.c.l.b16 %v606
        %v683 = vunpack.c.l.b16 %v607
        %v684 = vunpack.c.h.b16 %v607
        %v685 = vunpack.c.l.b16 %v608
        %v686 = vunpack.c.l.b16 %v609
        %v687 = vunpack.c.h.b16 %v609
        %v688 = vunpack.c.l.b16 %v610
        %v689 = vunpack.c.l.b16 %v611
        %v690 = vunpack.c.h.b16 %v611
        %v691 = vunpack.c.l.b16 %v612
        %v692 = vunpack.c.l.b16 %v613
        %v693 = vunpack.c.h.b16 %v613
        %v694 = vunpack.c.l.b16 %v614
        %v695 = vunpack.c.l.b16 %v615
        %v696 = vunpack.c.h.b16 %v615
        %v697 = vunpack.c.l.b16 %v616
        %v698 = vunpack.c.l.b16 %v617
        %v699 = vunpack.c.h.b16 %v617
        %v700 = vunpack.c.l.b16 %v618
        %v701 = vunpack.c.l.b16 %v619
        %v702 = vunpack.c.h.b16 %v619
        %v703 = vunpack.c.l.b16 %v620
        %v704 = vpack.c.b16 %v659, %v656
        %v705 = vpack.c.b16 %v660, %v657
        %v706 = vpack.c.b16 %v661, %v658
        %v707 = vpack.c.b16 %v665, %v662
        %v708 = vpack.c.b16 %v666, %v663
        %v709 = vpack.c.b16 %v667, %v664
        %v710 = vpack.c.b16 %v671, %v668
        %v711 = vpack.c.b16 %v672, %v669
        %v712 = vpack.c.b16 %v673, %v670
        %v713 = vpack.c.b16 %v677, %v674
        %v714 = vpack.c.b16 %v678, %v675
        %v715 = vpack.c.b16 %v679, %v676
        %v716 = vpack.c.b16 %v683, %v680
        %v717 = vpack.c.b16 %v684, %v681
        %v718 = vpack.c.b16 %v685, %v682
        %v719 = vpack.c.b16 %v689, %v686
        %v720 = vpack.c.b16 %v690, %v687
        %v721 = vpack.c.b16 %v691, %v688
        %v722 = vpack.c.b16 %v695, %v692
        %v723 = vpack.c.b16 %v696, %v693
        %v724 = vpack.c.b16 %v697, %v694
        %v725 = vpack.c.b16 %v701, %v698
        %v726 = vpack.c.b16 %v702, %v699
        %v727 = vpack.c.b16 %v703, %v700
        %752 = vmatpush.bf16.msra.mxu0 %v725
        %753 = vmatpush.bf16.msra.mxu0 %v722
        %754 = vmatpush.bf16.msra.mxu0 %v719
        %755 = vmatpush.bf16.msra.mxu0 %v716
        %756 = vmatpush.bf16.msra.mxu0 %v713
        %757 = vmatpush.bf16.msra.mxu0 %v710
        %758 = vmatpush.bf16.msra.mxu0 %v707
        %759 = vmatpush.bf16.msra.mxu0 %v704
        %760 = vmatmul.bf16.gmra.mxu0 %v588
        %v761 = vpop.f32.mrf.mxu0
        %v762 = vadd.f32 %v621, %v761
        %v763 = vpop.f32.mrf.mxu0
        %764 = vdwg.mxu0
        %765 = vmatpush.bf16.msra.mxu0 %v726
        %766 = vmatpush.bf16.msra.mxu0 %v723
        %767 = vmatpush.bf16.msra.mxu0 %v720
        %768 = vmatpush.bf16.msra.mxu0 %v717
        %769 = vmatpush.bf16.msra.mxu0 %v714
        %770 = vmatpush.bf16.msra.mxu0 %v711
        %771 = vmatpush.bf16.msra.mxu0 %v708
        %772 = vmatpush.bf16.msra.mxu0 %v705
        %773 = vmatmul.bf16.gmra.mxu0 %v588
        %v774 = vpop.f32.mrf.mxu0
        %v775 = vadd.f32 %v622, %v774
        %v776 = vpop.f32.mrf.mxu0
        %777 = vdwg.mxu0
        %778 = vmatpush.bf16.msra.mxu0 %v727
        %779 = vmatpush.bf16.msra.mxu0 %v724
        %780 = vmatpush.bf16.msra.mxu0 %v721
        %781 = vmatpush.bf16.msra.mxu0 %v718
        %782 = vmatpush.bf16.msra.mxu0 %v715
        %783 = vmatpush.bf16.msra.mxu0 %v712
        %784 = vmatpush.bf16.msra.mxu0 %v709
        %785 = vmatpush.bf16.msra.mxu0 %v706
        %786 = vmatmul.bf16.gmra.mxu0 %v588
        %v787 = vpop.f32.mrf.mxu0
        %v788 = vadd.f32 %v623, %v787
        %v789 = vpop.f32.mrf.mxu0
        %790 = vdwg.mxu0
        %792 = vrot.lane.b32.xlu0 %v762, 96
        %v793 = vpop.permute.xlu0 %792
        %795 = vrot.lane.b32.xlu0 %v762, 64
        %v796 = vpop.permute.xlu0 %795
        %798 = vrot.lane.b32.xlu0 %v762, 32
        %v799 = vpop.permute.xlu0 %798
        %v801 = vpack.c.bf16 %v762, %v762
        %v802 = vpack.c.bf16 %v793, %v793
        %v803 = vpack.c.bf16 %v796, %v796
        %v804 = vpack.c.bf16 %v799, %v799
        %806 = vrot.lane.b32.xlu0 %v775, 96
        %v807 = vpop.permute.xlu0 %806
        %809 = vrot.lane.b32.xlu0 %v775, 64
        %v810 = vpop.permute.xlu0 %809
        %812 = vrot.lane.b32.xlu0 %v775, 32
        %v813 = vpop.permute.xlu0 %812
        %v815 = vpack.c.bf16 %v775, %v775
        %v816 = vpack.c.bf16 %v807, %v807
        %v817 = vpack.c.bf16 %v810, %v810
        %v818 = vpack.c.bf16 %v813, %v813
        %820 = vrot.lane.b32.xlu0 %v788, 96
        %v821 = vpop.permute.xlu0 %820
        %823 = vrot.lane.b32.xlu0 %v788, 64
        %v824 = vpop.permute.xlu0 %823
        %826 = vrot.lane.b32.xlu0 %v788, 32
        %v827 = vpop.permute.xlu0 %826
        %v829 = vpack.c.bf16 %v788, %v788
        %v830 = vpack.c.bf16 %v821, %v821
        %v831 = vpack.c.bf16 %v824, %v824
        %v832 = vpack.c.bf16 %v827, %v827
        %vm833 = vcmask 261120
        %v835 = vsel %vm833, %v801, 0
        %v838 = vsel %vm833, %v815, 0
        %840 = vmatpush.bf16.xpose.msra.mxu0 0
        %841 = vmatpush.bf16.xpose.msra.mxu0 0
        %842 = vmatpush.bf16.xpose.msra.mxu0 0
        %843 = vmatpush.bf16.xpose.msra.mxu0 0
        %844 = vmatpush.bf16.xpose.msra.mxu0 0
        %845 = vmatpush.bf16.xpose.msra.mxu0 0
        %846 = vmatpush.bf16.xpose.msra.mxu0 0
        %847 = vmatpush.bf16.xpose.msra.mxu0 %v838
        %848 = vmatmul.bf16.gmra.mxu0 %v835
        %v849 = vpop.f32.mrf.mxu0
        %v850 = vadd.f32 0.0, %v849
        %v851 = vpop.f32.mrf.mxu0
        %852 = vdwg.mxu0
        %v854 = vsel %vm833, %v802, 0
        %v857 = vsel %vm833, %v816, 0
        %859 = vmatpush.bf16.xpose.msra.mxu0 0
        %860 = vmatpush.bf16.xpose.msra.mxu0 0
        %861 = vmatpush.bf16.xpose.msra.mxu0 0
        %862 = vmatpush.bf16.xpose.msra.mxu0 0
        %863 = vmatpush.bf16.xpose.msra.mxu0 0
        %864 = vmatpush.bf16.xpose.msra.mxu0 0
        %865 = vmatpush.bf16.xpose.msra.mxu0 0
        %866 = vmatpush.bf16.xpose.msra.mxu0 %v857
        %867 = vmatmul.bf16.gmra.mxu0 %v854
        %v868 = vpop.f32.mrf.mxu0
        %v869 = vadd.f32 0.0, %v868
        %v870 = vpop.f32.mrf.mxu0
        %871 = vdwg.mxu0
        %v873 = vsel %vm833, %v803, 0
        %v876 = vsel %vm833, %v817, 0
        %878 = vmatpush.bf16.xpose.msra.mxu0 0
        %879 = vmatpush.bf16.xpose.msra.mxu0 0
        %880 = vmatpush.bf16.xpose.msra.mxu0 0
        %881 = vmatpush.bf16.xpose.msra.mxu0 0
        %882 = vmatpush.bf16.xpose.msra.mxu0 0
        %883 = vmatpush.bf16.xpose.msra.mxu0 0
        %884 = vmatpush.bf16.xpose.msra.mxu0 0
        %885 = vmatpush.bf16.xpose.msra.mxu0 %v876
        %886 = vmatmul.bf16.gmra.mxu0 %v873
        %v887 = vpop.f32.mrf.mxu0
        %v888 = vadd.f32 0.0, %v887
        %v889 = vpop.f32.mrf.mxu0
        %890 = vdwg.mxu0
        %v892 = vsel %vm833, %v804, 0
        %v895 = vsel %vm833, %v818, 0
        %897 = vmatpush.bf16.xpose.msra.mxu0 0
        %898 = vmatpush.bf16.xpose.msra.mxu0 0
        %899 = vmatpush.bf16.xpose.msra.mxu0 0
        %900 = vmatpush.bf16.xpose.msra.mxu0 0
        %901 = vmatpush.bf16.xpose.msra.mxu0 0
        %902 = vmatpush.bf16.xpose.msra.mxu0 0
        %903 = vmatpush.bf16.xpose.msra.mxu0 0
        %904 = vmatpush.bf16.xpose.msra.mxu0 %v895
        %905 = vmatmul.bf16.gmra.mxu0 %v892
        %v906 = vpop.f32.mrf.mxu0
        %v907 = vadd.f32 0.0, %v906
        %v908 = vpop.f32.mrf.mxu0
        %909 = vdwg.mxu0
        %v910 = vmul.f32 %v850, 0.17677669
        %v911 = vmul.f32 %v869, 0.17677669
        %v912 = vmul.f32 %v888, 0.17677669
        %v913 = vmul.f32 %v907, 0.17677669
        %v914 = vld [vmem:[%s434] sm:$0xff]
        %v915 = vadd.f32 %v910, %v914
        %v916 = vadd.f32 %v911, %v914
        %v917 = vadd.f32 %v912, %v914
        %v918 = vadd.f32 %v913, %v914
        %vm919 = vcmask 64512
        %v920 = vsel %vm919, %v915, -inf
        %921 = vmax.xlane.f32.xlu0 %v920
        %v922 = vpop.xlane.xlu0 %921
        %v923 = vsel %vm919, %v916, -inf
        %924 = vmax.xlane.f32.xlu0 %v923
        %v925 = vpop.xlane.xlu0 %924
        %v926 = vsel %vm919, %v917, -inf
        %927 = vmax.xlane.f32.xlu0 %v926
        %v928 = vpop.xlane.xlu0 %927
        %v929 = vsel %vm919, %v918, -inf
        %930 = vmax.xlane.f32.xlu0 %v929
        %v931 = vpop.xlane.xlu0 %930
        %v932 = vsub.f32 %v915, %v922
        %v933 = vsub.f32 %v916, %v925
        %v934 = vsub.f32 %v917, %v928
        %v935 = vsub.f32 %v918, %v931
        %v936 = vmul.f32 %v932, 1.442695
        %v937 = vpow.pop %v936
        %v938 = vmul.f32 %v933, 1.442695
        %v939 = vpow.pop %v938
        %v940 = vmul.f32 %v934, 1.442695
        %v941 = vpow.pop %v940
        %v942 = vmul.f32 %v935, 1.442695
        %v943 = vpow.pop %v942
        %v944 = vsel %vm919, %v937, 0.0
        %945 = vadd.xlane.f32.xlu0 %v944
        %v946 = vpop.xlane.xlu0 %945
        %v947 = vsel %vm919, %v939, 0.0
        %948 = vadd.xlane.f32.xlu0 %v947
        %v949 = vpop.xlane.xlu0 %948
        %v950 = vsel %vm919, %v941, 0.0
        %951 = vadd.xlane.f32.xlu0 %v950
        %v952 = vpop.xlane.xlu0 %951
        %v953 = vsel %vm919, %v943, 0.0
        %954 = vadd.xlane.f32.xlu0 %v953
        %v955 = vpop.xlane.xlu0 %954
        %v956 = vrcp.pop %v946
        %v957 = vrcp.pop %v949
        %v958 = vrcp.pop %v952
        %v959 = vrcp.pop %v955
        %v960 = vmul.f32 %v937, %v956
        %v961 = vmul.f32 %v939, %v957
        %v962 = vmul.f32 %v941, %v958
        %v963 = vmul.f32 %v943, %v959
        %v964 = vpack.c.bf16 %v960, %v960
        %v965 = vpack.c.bf16 %v961, %v961
        %v966 = vpack.c.bf16 %v962, %v962
        %v967 = vpack.c.bf16 %v963, %v963
        %v969 = vsel %vm919, %v964, 0
        %vm971 = vcmask 1043456
        %v973 = vsel %vm971, %v829, 0
        %975 = vmatpush.bf16.msra.mxu0 0
        %976 = vmatpush.bf16.msra.mxu0 0
        %977 = vmatpush.bf16.msra.mxu0 0
        %978 = vmatpush.bf16.msra.mxu0 0
        %979 = vmatpush.bf16.msra.mxu0 0
        %980 = vmatpush.bf16.msra.mxu0 0
        %981 = vmatpush.bf16.msra.mxu0 0
        %982 = vmatpush.bf16.msra.mxu0 %v973
        %983 = vmatmul.bf16.gmra.mxu0 %v969
        %v984 = vpop.f32.mrf.mxu0
        %v985 = vadd.f32 0.0, %v984
        %v986 = vpop.f32.mrf.mxu0
        %987 = vdwg.mxu0
        %v989 = vsel %vm919, %v965, 0
        %v992 = vsel %vm971, %v830, 0
        %994 = vmatpush.bf16.msra.mxu0 0
        %995 = vmatpush.bf16.msra.mxu0 0
        %996 = vmatpush.bf16.msra.mxu0 0
        %997 = vmatpush.bf16.msra.mxu0 0
        %998 = vmatpush.bf16.msra.mxu0 0
        %999 = vmatpush.bf16.msra.mxu0 0
        %1000 = vmatpush.bf16.msra.mxu0 0
        %1001 = vmatpush.bf16.msra.mxu0 %v992
        %1002 = vmatmul.bf16.gmra.mxu0 %v989
        %v1003 = vpop.f32.mrf.mxu0
        %v1004 = vadd.f32 0.0, %v1003
        %v1005 = vpop.f32.mrf.mxu0
        %1006 = vdwg.mxu0
        %v1008 = vsel %vm919, %v966, 0
        %v1011 = vsel %vm971, %v831, 0
        %1013 = vmatpush.bf16.msra.mxu0 0
        %1014 = vmatpush.bf16.msra.mxu0 0
        %1015 = vmatpush.bf16.msra.mxu0 0
        %1016 = vmatpush.bf16.msra.mxu0 0
        %1017 = vmatpush.bf16.msra.mxu0 0
        %1018 = vmatpush.bf16.msra.mxu0 0
        %1019 = vmatpush.bf16.msra.mxu0 0
        %1020 = vmatpush.bf16.msra.mxu0 %v1011
        %1021 = vmatmul.bf16.gmra.mxu0 %v1008
        %v1022 = vpop.f32.mrf.mxu0
        %v1023 = vadd.f32 0.0, %v1022
        %v1024 = vpop.f32.mrf.mxu0
        %1025 = vdwg.mxu0
        %v1027 = vsel %vm919, %v967, 0
        %v1030 = vsel %vm971, %v832, 0
        %1032 = vmatpush.bf16.msra.mxu0 0
        %1033 = vmatpush.bf16.msra.mxu0 0
        %1034 = vmatpush.bf16.msra.mxu0 0
        %1035 = vmatpush.bf16.msra.mxu0 0
        %1036 = vmatpush.bf16.msra.mxu0 0
        %1037 = vmatpush.bf16.msra.mxu0 0
        %1038 = vmatpush.bf16.msra.mxu0 0
        %1039 = vmatpush.bf16.msra.mxu0 %v1030
        %1040 = vmatmul.bf16.gmra.mxu0 %v1027
        %v1041 = vpop.f32.mrf.mxu0
        %v1042 = vadd.f32 0.0, %v1041
        %v1043 = vpop.f32.mrf.mxu0
        %1044 = vdwg.mxu0
        %1046 = vrot.lane.b32.xlu0 %v1004, 32
        %v1047 = vpop.permute.xlu0 %1046
        %1050 = vrot.lane.b32.xlu0 %v1023, 64
        %v1051 = vpop.permute.xlu0 %1050
        %1054 = vrot.lane.b32.xlu0 %v1042, 96
        %v1055 = vpop.permute.xlu0 %1054
        %v1057 = vsel %vm833, %v985, %v1047
        %vm1058 = vcmask 523264
        %v1059 = vsel %vm1058, %v1057, %v1051
        %vm1060 = vcmask 785408
        %v1061 = vsel %vm1060, %v1059, %v1055
        %v1062 = vpack.c.bf16 %v1061, %v1061
        %v1063 = vld [vmem:[%s454] sm:$0xf]
        %v1064 = vld [vmem:[%s454 + $0x4] sm:$0xf]
        %v1065 = vld [vmem:[%s454 + $0x8] sm:$0xf]
        %v1066 = vld [vmem:[%s454 + $0xc] sm:$0xf]
        %v1067 = vld [vmem:[%s454 + $0x10] sm:$0xf]
        %v1068 = vld [vmem:[%s454 + $0x14] sm:$0xf]
        %v1069 = vld [vmem:[%s454 + $0x18] sm:$0xf]
        %v1070 = vld [vmem:[%s454 + $0x1c] sm:$0xf]
        %v1071 = vld [vmem:[%s454 + $0x20] sm:$0xf]
        %v1072 = vld [vmem:[%s454 + $0x24] sm:$0xf]
        %v1073 = vld [vmem:[%s454 + $0x28] sm:$0xf]
        %v1074 = vld [vmem:[%s454 + $0x2c] sm:$0xf]
        %v1075 = vld [vmem:[%s454 + $0x30] sm:$0xf]
        %v1076 = vld [vmem:[%s454 + $0x34] sm:$0xf]
        %v1077 = vld [vmem:[%s454 + $0x38] sm:$0xf]
        %v1078 = vld [vmem:[%s454 + $0x3c] sm:$0xf]
        %v1079 = vperm.slane %v554, 3
        %v1096 = vunpack.c.l.b16 %v1063
        %v1097 = vunpack.c.l.b16 %v1064
        %v1098 = vunpack.c.l.b16 %v1065
        %v1099 = vunpack.c.l.b16 %v1066
        %v1100 = vunpack.c.l.b16 %v1067
        %v1101 = vunpack.c.l.b16 %v1068
        %v1102 = vunpack.c.l.b16 %v1069
        %v1103 = vunpack.c.l.b16 %v1070
        %v1104 = vunpack.c.l.b16 %v1071
        %v1105 = vunpack.c.l.b16 %v1072
        %v1106 = vunpack.c.l.b16 %v1073
        %v1107 = vunpack.c.l.b16 %v1074
        %v1108 = vunpack.c.l.b16 %v1075
        %v1109 = vunpack.c.l.b16 %v1076
        %v1110 = vunpack.c.l.b16 %v1077
        %v1111 = vunpack.c.l.b16 %v1078
        %v1112 = vpack.c.b16 %v1097, %v1096
        %v1113 = vpack.c.b16 %v1099, %v1098
        %v1114 = vpack.c.b16 %v1101, %v1100
        %v1115 = vpack.c.b16 %v1103, %v1102
        %v1116 = vpack.c.b16 %v1105, %v1104
        %v1117 = vpack.c.b16 %v1107, %v1106
        %v1118 = vpack.c.b16 %v1109, %v1108
        %v1119 = vpack.c.b16 %v1111, %v1110
        %1128 = vmatpush.bf16.msra.mxu0 %v1119
        %1129 = vmatpush.bf16.msra.mxu0 %v1118
        %1130 = vmatpush.bf16.msra.mxu0 %v1117
        %1131 = vmatpush.bf16.msra.mxu0 %v1116
        %1132 = vmatpush.bf16.msra.mxu0 %v1115
        %1133 = vmatpush.bf16.msra.mxu0 %v1114
        %1134 = vmatpush.bf16.msra.mxu0 %v1113
        %1135 = vmatpush.bf16.msra.mxu0 %v1112
        %1136 = vmatmul.bf16.gmra.mxu0 %v1062
        %v1137 = vpop.f32.mrf.mxu0
        %v1138 = vadd.f32 %v1079, %v1137
        %v1139 = vpop.f32.mrf.mxu0
        %1140 = vdwg.mxu0
        %v1141 = vadd.f32 %v1138, %v553
        %1142 = vadd.xlane.f32.xlu0 %v1141
        %v1143 = vpop.xlane.xlu0 %1142
        %v1144 = vmul.f32 %v1143, %v565
        %v1145 = vsub.f32 %v1141, %v1144
        %v1146 = vmul.f32 %v1145, %v1145
        %1147 = vadd.xlane.f32.xlu0 %v1146
        %v1148 = vpop.xlane.xlu0 %1147
        %v1149 = vmul.f32 %v1148, %v565
        %v1150 = vadd.f32 %v1149, 1e-05
        %v1151 = vrsqrt.pop %v1150
        %v1152 = vmul.f32 %v1151, %v1150
        %v1153 = vmul.f32 %v1152, %v1151
        %v1154 = vmul.f32 0.5, %v1153
        %v1155 = vsub.f32 1.5, %v1154
        %v1156 = vmul.f32 %v1151, %v1155
        %vm1157 = vweird.f32 %v1150
        %vm1158 = vweird.f32 %v1151
        %vm1159 = vmor %vm1157, %vm1158
        %v1160 = vsel %vm1159, %v1151, %v1156
        %v1161 = vmul.f32 %v1145, %v1160
        %v1162 = vperm.slane %v554, 4
        %v1163 = vmul.f32 %v1161, %v1162
        %v1164 = vperm.slane %v554, 5
        %v1165 = vadd.f32 %v1163, %v1164
        %v1166 = vpack.c.bf16 %v1165, %v1165
        %v1167 = vld [vmem:[%s464] sm:$0xff]
        %v1168 = vld [vmem:[%s464 + $0x8] sm:$0xff]
        %v1169 = vld [vmem:[%s464 + $0x10] sm:$0xff]
        %v1170 = vld [vmem:[%s464 + $0x18] sm:$0xff]
        %v1171 = vld [vmem:[%s464 + $0x20] sm:$0xff]
        %v1172 = vld [vmem:[%s464 + $0x28] sm:$0xff]
        %v1173 = vld [vmem:[%s464 + $0x30] sm:$0xff]
        %v1174 = vld [vmem:[%s464 + $0x38] sm:$0xff]
        %v1175 = vld [vmem:[%s464 + $0x40] sm:$0xff]
        %v1176 = vld [vmem:[%s464 + $0x48] sm:$0xff]
        %v1177 = vld [vmem:[%s464 + $0x50] sm:$0xff]
        %v1178 = vld [vmem:[%s464 + $0x58] sm:$0xff]
        %v1179 = vld [vmem:[%s464 + $0x60] sm:$0xff]
        %v1180 = vld [vmem:[%s464 + $0x68] sm:$0xff]
        %v1181 = vld [vmem:[%s464 + $0x70] sm:$0xff]
        %v1182 = vld [vmem:[%s464 + $0x78] sm:$0xff]
        %v1183 = vperm.slane %v554, 6
        %v1184 = vperm.slane %v555, 6
        %v1201 = vunpack.c.l.b16 %v1167
        %v1202 = vunpack.c.h.b16 %v1167
        %v1203 = vunpack.c.l.b16 %v1168
        %v1204 = vunpack.c.h.b16 %v1168
        %v1205 = vunpack.c.l.b16 %v1169
        %v1206 = vunpack.c.h.b16 %v1169
        %v1207 = vunpack.c.l.b16 %v1170
        %v1208 = vunpack.c.h.b16 %v1170
        %v1209 = vunpack.c.l.b16 %v1171
        %v1210 = vunpack.c.h.b16 %v1171
        %v1211 = vunpack.c.l.b16 %v1172
        %v1212 = vunpack.c.h.b16 %v1172
        %v1213 = vunpack.c.l.b16 %v1173
        %v1214 = vunpack.c.h.b16 %v1173
        %v1215 = vunpack.c.l.b16 %v1174
        %v1216 = vunpack.c.h.b16 %v1174
        %v1217 = vunpack.c.l.b16 %v1175
        %v1218 = vunpack.c.h.b16 %v1175
        %v1219 = vunpack.c.l.b16 %v1176
        %v1220 = vunpack.c.h.b16 %v1176
        %v1221 = vunpack.c.l.b16 %v1177
        %v1222 = vunpack.c.h.b16 %v1177
        %v1223 = vunpack.c.l.b16 %v1178
        %v1224 = vunpack.c.h.b16 %v1178
        %v1225 = vunpack.c.l.b16 %v1179
        %v1226 = vunpack.c.h.b16 %v1179
        %v1227 = vunpack.c.l.b16 %v1180
        %v1228 = vunpack.c.h.b16 %v1180
        %v1229 = vunpack.c.l.b16 %v1181
        %v1230 = vunpack.c.h.b16 %v1181
        %v1231 = vunpack.c.l.b16 %v1182
        %v1232 = vunpack.c.h.b16 %v1182
        %v1233 = vpack.c.b16 %v1203, %v1201
        %v1234 = vpack.c.b16 %v1204, %v1202
        %v1235 = vpack.c.b16 %v1207, %v1205
        %v1236 = vpack.c.b16 %v1208, %v1206
        %v1237 = vpack.c.b16 %v1211, %v1209
        %v1238 = vpack.c.b16 %v1212, %v1210
        %v1239 = vpack.c.b16 %v1215, %v1213
        %v1240 = vpack.c.b16 %v1216, %v1214
        %v1241 = vpack.c.b16 %v1219, %v1217
        %v1242 = vpack.c.b16 %v1220, %v1218
        %v1243 = vpack.c.b16 %v1223, %v1221
        %v1244 = vpack.c.b16 %v1224, %v1222
        %v1245 = vpack.c.b16 %v1227, %v1225
        %v1246 = vpack.c.b16 %v1228, %v1226
        %v1247 = vpack.c.b16 %v1231, %v1229
        %v1248 = vpack.c.b16 %v1232, %v1230
        %1265 = vmatpush.bf16.msra.mxu0 %v1247
        %1266 = vmatpush.bf16.msra.mxu0 %v1245
        %1267 = vmatpush.bf16.msra.mxu0 %v1243
        %1268 = vmatpush.bf16.msra.mxu0 %v1241
        %1269 = vmatpush.bf16.msra.mxu0 %v1239
        %1270 = vmatpush.bf16.msra.mxu0 %v1237
        %1271 = vmatpush.bf16.msra.mxu0 %v1235
        %1272 = vmatpush.bf16.msra.mxu0 %v1233
        %1273 = vmatmul.bf16.gmra.mxu0 %v1166
        %v1274 = vpop.f32.mrf.mxu0
        %v1275 = vadd.f32 %v1183, %v1274
        %v1276 = vpop.f32.mrf.mxu0
        %1277 = vdwg.mxu0
        %1278 = vmatpush.bf16.msra.mxu0 %v1248
        %1279 = vmatpush.bf16.msra.mxu0 %v1246
        %1280 = vmatpush.bf16.msra.mxu0 %v1244
        %1281 = vmatpush.bf16.msra.mxu0 %v1242
        %1282 = vmatpush.bf16.msra.mxu0 %v1240
        %1283 = vmatpush.bf16.msra.mxu0 %v1238
        %1284 = vmatpush.bf16.msra.mxu0 %v1236
        %1285 = vmatpush.bf16.msra.mxu0 %v1234
        %1286 = vmatmul.bf16.gmra.mxu0 %v1166
        %v1287 = vpop.f32.mrf.mxu0
        %v1288 = vadd.f32 %v1184, %v1287
        %v1289 = vpop.f32.mrf.mxu0
        %1290 = vdwg.mxu0
        %v1291 = vmax.f32 %v1275, 0.0
        %v1292 = vmax.f32 %v1288, 0.0
        %v1293 = vpack.c.bf16 %v1291, %v1291
        %v1294 = vpack.c.bf16 %v1292, %v1292
        %v1295 = vld [vmem:[%s474] sm:$0xf]
        %v1296 = vld [vmem:[%s474 + $0x4] sm:$0xf]
        %v1297 = vld [vmem:[%s474 + $0x8] sm:$0xf]
        %v1298 = vld [vmem:[%s474 + $0xc] sm:$0xf]
        %v1299 = vld [vmem:[%s474 + $0x10] sm:$0xf]
        %v1300 = vld [vmem:[%s474 + $0x14] sm:$0xf]
        %v1301 = vld [vmem:[%s474 + $0x18] sm:$0xf]
        %v1302 = vld [vmem:[%s474 + $0x1c] sm:$0xf]
        %v1303 = vld [vmem:[%s474 + $0x20] sm:$0xf]
        %v1304 = vld [vmem:[%s474 + $0x24] sm:$0xf]
        %v1305 = vld [vmem:[%s474 + $0x28] sm:$0xf]
        %v1306 = vld [vmem:[%s474 + $0x2c] sm:$0xf]
        %v1307 = vld [vmem:[%s474 + $0x30] sm:$0xf]
        %v1308 = vld [vmem:[%s474 + $0x34] sm:$0xf]
        %v1309 = vld [vmem:[%s474 + $0x38] sm:$0xf]
        %v1310 = vld [vmem:[%s474 + $0x3c] sm:$0xf]
        %v1311 = vld [vmem:[%s474 + $0x40] sm:$0xf]
        %v1312 = vld [vmem:[%s474 + $0x44] sm:$0xf]
        %v1313 = vld [vmem:[%s474 + $0x48] sm:$0xf]
        %v1314 = vld [vmem:[%s474 + $0x4c] sm:$0xf]
        %v1315 = vld [vmem:[%s474 + $0x50] sm:$0xf]
        %v1316 = vld [vmem:[%s474 + $0x54] sm:$0xf]
        %v1317 = vld [vmem:[%s474 + $0x58] sm:$0xf]
        %v1318 = vld [vmem:[%s474 + $0x5c] sm:$0xf]
        %v1319 = vld [vmem:[%s474 + $0x60] sm:$0xf]
        %v1320 = vld [vmem:[%s474 + $0x64] sm:$0xf]
        %v1321 = vld [vmem:[%s474 + $0x68] sm:$0xf]
        %v1322 = vld [vmem:[%s474 + $0x6c] sm:$0xf]
        %v1323 = vld [vmem:[%s474 + $0x70] sm:$0xf]
        %v1324 = vld [vmem:[%s474 + $0x74] sm:$0xf]
        %v1325 = vld [vmem:[%s474 + $0x78] sm:$0xf]
        %v1326 = vld [vmem:[%s474 + $0x7c] sm:$0xf]
        %v1327 = vperm.slane %v554, 7
        %v1360 = vunpack.c.l.b16 %v1295
        %v1361 = vunpack.c.l.b16 %v1296
        %v1362 = vunpack.c.l.b16 %v1297
        %v1363 = vunpack.c.l.b16 %v1298
        %v1364 = vunpack.c.l.b16 %v1299
        %v1365 = vunpack.c.l.b16 %v1300
        %v1366 = vunpack.c.l.b16 %v1301
        %v1367 = vunpack.c.l.b16 %v1302
        %v1368 = vunpack.c.l.b16 %v1303
        %v1369 = vunpack.c.l.b16 %v1304
        %v1370 = vunpack.c.l.b16 %v1305
        %v1371 = vunpack.c.l.b16 %v1306
        %v1372 = vunpack.c.l.b16 %v1307
        %v1373 = vunpack.c.l.b16 %v1308
        %v1374 = vunpack.c.l.b16 %v1309
        %v1375 = vunpack.c.l.b16 %v1310
        %v1376 = vunpack.c.l.b16 %v1311
        %v1377 = vunpack.c.l.b16 %v1312
        %v1378 = vunpack.c.l.b16 %v1313
        %v1379 = vunpack.c.l.b16 %v1314
        %v1380 = vunpack.c.l.b16 %v1315
        %v1381 = vunpack.c.l.b16 %v1316
        %v1382 = vunpack.c.l.b16 %v1317
        %v1383 = vunpack.c.l.b16 %v1318
        %v1384 = vunpack.c.l.b16 %v1319
        %v1385 = vunpack.c.l.b16 %v1320
        %v1386 = vunpack.c.l.b16 %v1321
        %v1387 = vunpack.c.l.b16 %v1322
        %v1388 = vunpack.c.l.b16 %v1323
        %v1389 = vunpack.c.l.b16 %v1324
        %v1390 = vunpack.c.l.b16 %v1325
        %v1391 = vunpack.c.l.b16 %v1326
        %v1392 = vpack.c.b16 %v1361, %v1360
        %v1393 = vpack.c.b16 %v1363, %v1362
        %v1394 = vpack.c.b16 %v1365, %v1364
        %v1395 = vpack.c.b16 %v1367, %v1366
        %v1396 = vpack.c.b16 %v1369, %v1368
        %v1397 = vpack.c.b16 %v1371, %v1370
        %v1398 = vpack.c.b16 %v1373, %v1372
        %v1399 = vpack.c.b16 %v1375, %v1374
        %v1400 = vpack.c.b16 %v1377, %v1376
        %v1401 = vpack.c.b16 %v1379, %v1378
        %v1402 = vpack.c.b16 %v1381, %v1380
        %v1403 = vpack.c.b16 %v1383, %v1382
        %v1404 = vpack.c.b16 %v1385, %v1384
        %v1405 = vpack.c.b16 %v1387, %v1386
        %v1406 = vpack.c.b16 %v1389, %v1388
        %v1407 = vpack.c.b16 %v1391, %v1390
        %1424 = vmatpush.bf16.msra.mxu0 %v1399
        %1425 = vmatpush.bf16.msra.mxu0 %v1398
        %1426 = vmatpush.bf16.msra.mxu0 %v1397
        %1427 = vmatpush.bf16.msra.mxu0 %v1396
        %1428 = vmatpush.bf16.msra.mxu0 %v1395
        %1429 = vmatpush.bf16.msra.mxu0 %v1394
        %1430 = vmatpush.bf16.msra.mxu0 %v1393
        %1431 = vmatpush.bf16.msra.mxu0 %v1392
        %1432 = vmatmul.bf16.gmra.mxu0 %v1293
        %v1433 = vpop.f32.mrf.mxu0
        %v1434 = vadd.f32 %v1327, %v1433
        %v1435 = vpop.f32.mrf.mxu0
        %1436 = vdwg.mxu0
        %1437 = vmatpush.bf16.msra.mxu0 %v1407
        %1438 = vmatpush.bf16.msra.mxu0 %v1406
        %1439 = vmatpush.bf16.msra.mxu0 %v1405
        %1440 = vmatpush.bf16.msra.mxu0 %v1404
        %1441 = vmatpush.bf16.msra.mxu0 %v1403
        %1442 = vmatpush.bf16.msra.mxu0 %v1402
        %1443 = vmatpush.bf16.msra.mxu0 %v1401
        %1444 = vmatpush.bf16.msra.mxu0 %v1400
        %1445 = vmatmul.bf16.gmra.mxu0 %v1294
        %v1446 = vpop.f32.mrf.mxu0
        %v1447 = vadd.f32 %v1434, %v1446
        %v1448 = vpop.f32.mrf.mxu0
        %1449 = vdwg.mxu0
        %v1450 = vadd.f32 %v1447, %v1141
        %1451 = vst [vmem:[#allocation2] sm:$0xff] %v1450
        %p1452 = scmp.eq.s32.totalorder %s38, 1
        // Predicated region
        $region81: #{tpu_custom_call.1} parent=47 // pred_check
          %p1453 = pneg %p1452
        $region82: #{tpu_custom_call.1} parent=47 // pred_check_branch
          %1455 = sbr.rel (%p1453) target = $region84
        $region83: #{tpu_custom_call.1} parent=47 // pred_region
          %1456 = vst [vmem:[%s545] sm:$0xff] %v1450
        $region84: #{tpu_custom_call.1} parent=47 // pred_fallthru
          _
        %s1457 = sand.u32 %s235, 1
        %s1458 = scalar_lea.sflag [#allocation5], %s1457
        %s1459 = sand.u32 %s235, 1
        %s1460 = smul.addr %s1459, 8
        %s1461 = scalar_lea.vmem [#allocation15], %s1460
        // Predicated region
        $region85: #{tpu_custom_call.1} parent=47 // pred_check
          %p1462 = pneg %p245
        $region86: #{tpu_custom_call.1} parent=47 // pred_check_branch
          %1464 = sbr.rel (%p1462) target = $region88
        $region87: #{tpu_custom_call.1} parent=47 // pred_region
          %1466 = vsyncadd %s1458, 0
          %s1467 = smul.addr %s37, 8
          %s1468 = scalar_lea.hbm %s7, %s1467
          %s1470 = sshll.u32 %s1461, 4
          %s1471 = int_to_ptr.vmem [resolvable:$true] %s1470
          %s1472 = sshll.u32 %s1468, 4
          %s1473 = int_to_ptr.hbm [resolvable:$true] %s1472
          %1475 = dma.vmem_to_hbm [thread:$0]  %s1471, 128, %s1473, %s1458
        $region88: #{tpu_custom_call.1} parent=47 // pred_fallthru
          _
      $region48: #{tpu_custom_call.1} parent=5 // pred_fallthru
        _
      %p1476 = scmp.le.s32.totalorder 2, %s28
      // Predicated region
      $region89: #{tpu_custom_call.1} parent=5 // pred_check
        %p1477 = pneg %p1476
      $region90: #{tpu_custom_call.1} parent=5 // pred_check_branch
        %1479 = sbr.rel (%p1477) target = $region92
      $region91: #{tpu_custom_call.1} parent=5 // pred_region
        %s1480 = ssub.s32 %s28, 2
        // Predicated region
        $region93: #{tpu_custom_call.1} parent=91 // pred_check
          %p1481 = pneg %p251
        $region94: #{tpu_custom_call.1} parent=91 // pred_check_branch
          %1483 = sbr.rel (%p1481) target = $region96
        $region95: #{tpu_custom_call.1} parent=91 // pred_region
          %s1484 = sand.u32 %s236, 1
          %s1485 = scalar_lea.sflag [#allocation5], %s1484
          %s1486 = sand.u32 %s236, 1
          %s1487 = smul.addr %s1486, 8
          %s1488 = scalar_lea.vmem [#allocation15], %s1487
          %1490 = dma.done %s1485, 128
        $region96: #{tpu_custom_call.1} parent=91 // pred_fallthru
          _
      $region92: #{tpu_custom_call.1} parent=5 // pred_fallthru
        _
    $region6: #{tpu_custom_call.1} parent=1 // loop_footer
      %s32 = sadd.s32 1, %s28
    $region7: #{tpu_custom_call.1} parent=1 // loop_footer_branch
      %27 = sbr.rel target = $region3
    $region8: #{tpu_custom_call.1} parent=1 // loop_exit
      _
    %1491 = vsyncpa [#allocation4], 1
    %s1492 = scalar_lea.sflag [#allocation4], 1
    %1493 = vsyncpa %s1492, 1
    %1494 = vsyncpa [#allocation7], 1
    %s1495 = scalar_lea.sflag [#allocation7], 1
    %1496 = vsyncpa %s1495, 1
    %1497 = vsyncpa [#allocation10], 1
    %s1498 = scalar_lea.sflag [#allocation10], 1
    %1499 = vsyncpa %s1498, 1
    %1500 = vsyncpa [#allocation13], 1
    %s1501 = scalar_lea.sflag [#allocation13], 1
    %1502 = vsyncpa %s1501, 1
    %1503 = vsyncpa [#allocation5], 1
    %s1504 = scalar_lea.sflag [#allocation5], 1
    %1505 = vsyncpa %s1504, 1

</llo_original>
